<compile_context>
chip_gen: v5e
topology: v5e:2x2
jax: 0.10.0
libtpu: 0.0.40
codegen_flags: <defaults>
</compile_context>

<pallas_src>
import jax
import jax.numpy as jnp
from jax.experimental import pallas as pl
from jax.experimental.pallas import tpu as pltpu


def _apply_single_attention_kernel(v_ref, q_ref, atten_ref,
                                   wv_ref, bv_ref,
                                   wq_ref, bq_ref,
                                   wa_ref, ba_ref,
                                   out_ref):
    tb, mid = out_ref.shape
    num_obj = v_ref.shape[0] // tb
    q_len = q_ref.shape[0] // tb
    cdt = wv_ref.dtype  # MXU operand dtype (f32 default, bf16 when operand_dtype is set)

    # --- Projections: batch tile pre-merged into the matmul M dimension by the wrapper,
    # so each projection is ONE MXU pass with M = tb*num_obj / tb*q_len rows. ---
    vproj = jnp.maximum(
        jnp.dot(v_ref[...], wv_ref[...], preferred_element_type=jnp.float32)
        + bv_ref[...], 0.0)                                    # (tb*num_obj, mid) f32
    qproj = jnp.maximum(
        jnp.dot(q_ref[...], wq_ref[...], preferred_element_type=jnp.float32)
        + bq_ref[...], 0.0)                                    # (tb*q_len,  mid) f32

    if q_len < 64:
        # --- Bilinear application on the VPU. The attention contraction has K = q_len
        # (8..36 for BAN), which would pad to 128/256 on the MXU and decompose into tb
        # micro-matmuls. The VPU/XLU slots are idle under the projection matmuls, so this
        # fully-unrolled multiply-add loop (trace-time unrolled, static indices) is ~free.
        a2d = atten_ref[...].astype(jnp.float32)               # (tb, num_obj*q_len) lane-dense
        vproj3 = vproj.reshape(tb, num_obj, mid)
        qproj3 = qproj.reshape(tb, q_len, mid)
        v_rows = [vproj3[:, i, :] for i in range(num_obj)]     # hoisted static slices
        q_rows = [qproj3[:, j, :] for j in range(q_len)]
        h = jnp.zeros((tb, mid), jnp.float32)
        for i in range(num_obj):
            col0 = i * q_len
            m_i = a2d[:, col0:col0 + 1] * q_rows[0]            # (tb,1) lane-broadcast * (tb,mid)
            for j in range(1, q_len):
                m_i = m_i + a2d[:, col0 + j:col0 + j + 1] * q_rows[j]
            h = h + v_rows[i] * m_i                            # (tb, mid) f32
    else:
        # Long-q_len fallback: keep the attention contraction on the MXU.
        a3 = atten_ref[...].reshape(tb, num_obj, q_len).astype(cdt)
        m = jnp.einsum("bij,bjc->bic", a3,
                       qproj.reshape(tb, q_len, mid).astype(cdt),
                       preferred_element_type=jnp.float32)
        h = jnp.sum(vproj.reshape(tb, num_obj, mid) * m, axis=1)

    # --- Final linear with M = tb rows per grid step (not an M=1 GEMV per batch). ---
    out = jnp.dot(h.astype(cdt), wa_ref[...],
                  preferred_element_type=jnp.float32) + ba_ref[...]
    out_ref[...] = out.astype(out_ref.dtype)                   # (tb, mid) lane-dense store


def _tpu_generation_config():
    """Best-effort generation detection (safe fallback if the device kind is unknown)."""
    kind = ""
    try:
        kind = jax.devices()[0].device_kind.lower()
    except Exception:
        pass
    if "v5 lite" in kind or "v5e" in kind or "v5lite" in kind:
        return dict(name="v5e", vmem_limit=96 << 20, target_rows=128, num_cores=1)
    if "v6" in kind:
        return dict(name="v6e", vmem_limit=96 << 20, target_rows=256, num_cores=1)
    if "7x" in kind or "v7" in kind:
        return dict(name="v7x", vmem_limit=48 << 20, target_rows=256, num_cores=2)
    return dict(name="generic", vmem_limit=None, target_rows=256, num_cores=1)


def _pick_batch_tile(B, num_obj, q_len, v_feat, q_feat, mid, *,
                     operand_bytes, weight_buffer_count, vmem_budget_bytes,
                     target_rows, num_cores):
    """Pick a legal batch tile (divisor of B; tb == B or tb % 8 == 0 so the (tb, mid) output
    block satisfies the sublane rule) whose FULL VMEM footprint — double-buffered activation
    tiles, resident weights, and the f32 intermediates vproj/qproj — fits the budget.
    Prefers >= 2 grid steps per TensorCore on multi-core parts and stops growing once the
    MXU is fed with ~target_rows rows."""
    cands = [tb for tb in range(1, B + 1)
             if B % tb == 0 and (tb == B or tb % 8 == 0)]

    weight_bytes = (weight_buffer_count * operand_bytes *
                    (v_feat * mid + q_feat * mid + mid * mid) + 2 * 3 * 4 * mid)

    def footprint(tb):
        act = 2 * operand_bytes * tb * (num_obj * v_feat + q_len * q_feat
                                        + num_obj * q_len)      # double-buffered inputs
        act += 2 * 4 * tb * mid                                  # double-buffered f32 output
        inter = 4 * tb * (num_obj + q_len + 4) * mid             # f32 vproj/qproj/h temporaries
        return weight_bytes + act + inter

    fitting = [tb for tb in cands if footprint(tb) <= vmem_budget_bytes] or cands[:1]
    if num_cores > 1:
        for steps in (2 * num_cores, num_cores):
            pruned = [tb for tb in fitting if B // tb >= steps]
            if pruned:
                fitting = pruned
                break
    for tb in fitting:                    # smallest tile that already feeds the MXU well
        if tb * min(num_obj, q_len) >= target_rows:
            return tb
    return fitting[-1]                    # otherwise the largest that fits


def apply_single_attention(v, q, v_mask, q_mask, atten, logits, params, *,
                           operand_dtype=None, batch_tile=None):
    """v:(B,No,Dv) q:(B,Nq,Dq) atten:(B,No,Nq) -> (B,1,mid).  v_mask/q_mask/logits unused
    (matches the PyTorch forward).  operand_dtype=jnp.bfloat16 enables bf16 MXU operands with
    f32 accumulation on ANY TPU generation (v5e included): only the MXU consumes the bf16
    operands; bias/relu/reduce stay f32."""
    del v_mask, q_mask, logits  # unused by the PyTorch forward as well
    B, num_obj, v_feat = v.shape
    _, q_len, q_feat = q.shape
    wv, bv, wq, bq, wa, ba = (params[k] for k in ("wv", "bv", "wq", "bq", "wa", "ba"))
    mid = wv.shape[1]

    if operand_dtype is not None:
        # For production, pre-cast the weights stored in `params` once at init instead of
        # per call — the per-call cast is an extra HBM round trip over the weights.
        v, q, atten = (x.astype(operand_dtype) for x in (v, q, atten))
        wv, wq, wa = (w if w.dtype == operand_dtype else w.astype(operand_dtype)
                      for w in (wv, wq, wa))
    bv, bq, ba = (b.astype(jnp.float32) for b in (bv, bq, ba))

    cfg = _tpu_generation_config()
    operand_bytes = jnp.dtype(operand_dtype or jnp.float32).itemsize
    budget = int(0.85 * (cfg["vmem_limit"] if cfg["vmem_limit"] is not None else 16 << 20))
    tb = batch_tile if batch_tile is not None else _pick_batch_tile(
        B, num_obj, q_len, v_feat, q_feat, mid,
        operand_bytes=operand_bytes, weight_buffer_count=1,
        vmem_budget_bytes=budget, target_rows=cfg["target_rows"],
        num_cores=cfg["num_cores"])
    assert B % tb == 0 and (tb == B or tb % 8 == 0), (
        f"batch_tile={tb} must divide B={B} and be a multiple of 8 (or equal B)")

    # Lane/sublane-dense operand layouts: merge batch into the matmul M dimension and
    # flatten atten so its DMA rows are lane-dense (wrapper-side reshapes are metadata-only).
    v2 = v.reshape(B * num_obj, v_feat)
    q2 = q.reshape(B * q_len, q_feat)
    a2 = atten.reshape(B, num_obj * q_len)

    cost = pl.CostEstimate(
        flops=2 * B * (num_obj * v_feat * mid + q_len * q_feat * mid
                       + num_obj * q_len * mid + num_obj * mid + mid * mid),
        transcendentals=0,
        bytes_accessed=((v2.size + q2.size + a2.size
                         + wv.size + wq.size + wa.size) * operand_bytes
                        + (bv.size + bq.size + ba.size) * 4 + B * mid * 4))

    def run(weight_buffer_count):
        wmode = ({} if weight_buffer_count == 2
                 else dict(pipeline_mode=pl.Buffered(weight_buffer_count)))
        grid_spec = pltpu.PrefetchScalarGridSpec(
            num_scalar_prefetch=0,
            grid=(B // tb,),
            in_specs=[
                pl.BlockSpec((tb * num_obj, v_feat), lambda b: (b, 0)),
                pl.BlockSpec((tb * q_len, q_feat), lambda b: (b, 0)),
                pl.BlockSpec((tb, num_obj * q_len), lambda b: (b, 0)),
                # Constant (grid-invariant) weight/bias blocks: single VMEM buffer.
                pl.BlockSpec((v_feat, mid), lambda b: (0, 0), **wmode),
                pl.BlockSpec((1, mid), lambda b: (0, 0), **wmode),
                pl.BlockSpec((q_feat, mid), lambda b: (0, 0), **wmode),
                pl.BlockSpec((1, mid), lambda b: (0, 0), **wmode),
                pl.BlockSpec((mid, mid), lambda b: (0, 0), **wmode),
                pl.BlockSpec((1, mid), lambda b: (0, 0), **wmode),
            ],
            # 2-D lane/sublane-dense output slab; unsqueeze to (B,1,mid) in the wrapper.
            out_specs=pl.BlockSpec((tb, mid), lambda b: (b, 0)),
        )
        cp_kwargs = dict(dimension_semantics=("parallel",))
        if cfg["vmem_limit"] is not None:
            cp_kwargs["vmem_limit_bytes"] = cfg["vmem_limit"]
        return pl.pallas_call(
            _apply_single_attention_kernel,
            out_shape=jax.ShapeDtypeStruct((B, mid), jnp.float32),
            grid_spec=grid_spec,
            compiler_params=pltpu.CompilerParams(**cp_kwargs),
            cost_estimate=cost,
        )(v2, q2, a2, wv, bv, wq, bq, wa, ba)

    try:
        out2d = run(weight_buffer_count=1)      # single-buffer the constant weights
    except Exception:
        out2d = run(weight_buffer_count=2)      # fallback if Buffered(1) is unsupported
    return out2d[:, None, :]                    # (B, 1, mid)


def _reference(v, q, atten, params):
    """Pure-JAX reference of the PyTorch forward for verification."""
    wv, bv, wq, bq, wa, ba = (params[k] for k in ("wv", "bv", "wq", "bq", "wa", "ba"))
    v_ = jax.nn.relu(jnp.einsum("bod,dm->bom", v, wv) + bv)   # (B, No, mid)
    q_ = jax.nn.relu(jnp.einsum("bqd,dm->bqm", q, wq) + bq)   # (B, Nq, mid)
    h = jnp.einsum("bom,boq,bqm->bm", v_, atten, q_)          # (B, mid)
    out = jnp.einsum("bm,mn->bn", h, wa) + ba                 # (B, mid)
    return out[:, None, :]                                    # (B, 1, mid)


def _init_params(key, v_feat, q_feat, mid):
    ks = jax.random.split(key, 6)
    scale = 0.1
    return {
        "wv": scale * jax.random.normal(ks[0], (v_feat, mid), jnp.float32),
        "bv": scale * jax.random.normal(ks[1], (1, mid), jnp.float32),
        "wq": scale * jax.random.normal(ks[2], (q_feat, mid), jnp.float32),
        "bq": scale * jax.random.normal(ks[3], (1, mid), jnp.float32),
        "wa": scale * jax.random.normal(ks[4], (mid, mid), jnp.float32),
        "ba": scale * jax.random.normal(ks[5], (1, mid), jnp.float32),
    }


if __name__ == "__main__":
    B, NUM_OBJ, Q_LEN = 2, 8, 8
    V_FEAT, Q_FEAT, MID = 32, 32, 32

    key = jax.random.PRNGKey(0)
    kv, kq, ka, kp = jax.random.split(key, 4)

    v = jax.random.normal(kv, (B, NUM_OBJ, V_FEAT), jnp.float32)
    q = jax.random.normal(kq, (B, Q_LEN, Q_FEAT), jnp.float32)
    atten = jax.nn.softmax(
        jax.random.normal(ka, (B, NUM_OBJ, Q_LEN), jnp.float32).reshape(B, -1), axis=-1
    ).reshape(B, NUM_OBJ, Q_LEN)
    v_mask = jnp.ones((B, NUM_OBJ), jnp.float32)          # unused by forward
    q_mask = jnp.ones((B, Q_LEN), jnp.float32)            # unused by forward
    logits = jnp.zeros((B, NUM_OBJ, Q_LEN), jnp.float32)  # unused by forward

    params = _init_params(kp, V_FEAT, Q_FEAT, MID)

    # Exact f32 path.
    out = apply_single_attention(v, q, v_mask, q_mask, atten, logits, params)
    out = jax.block_until_ready(out)
    ref = _reference(v, q, atten, params)
    assert out.shape == (B, 1, MID), out.shape
    assert jnp.allclose(out, ref, atol=1e-5, rtol=1e-5), "f32 mismatch vs reference"

    # bf16-operand MXU path (valid on every generation incl. v5e); loose bf16 tolerance.
    out_bf16 = apply_single_attention(v, q, v_mask, q_mask, atten, logits, params,
                                      operand_dtype=jnp.bfloat16)
    out_bf16 = jax.block_until_ready(out_bf16)
    assert jnp.allclose(out_bf16, ref, atol=5e-2, rtol=5e-2), "bf16 mismatch vs reference"

    print("KERNEL_OK")
</pallas_src>

<mosaic_0001>
module attributes {stable_mosaic.version = 11 : i64} {
  func.func @_apply_single_attention_kernel(%arg0: i32, %arg1: memref<16x32xf32, #tpu.memory_space<vmem>>, %arg2: memref<16x32xf32, #tpu.memory_space<vmem>>, %arg3: memref<2x64xf32, #tpu.memory_space<vmem>>, %arg4: memref<32x32xf32, #tpu.memory_space<vmem>>, %arg5: memref<1x32xf32, #tpu.memory_space<vmem>>, %arg6: memref<32x32xf32, #tpu.memory_space<vmem>>, %arg7: memref<1x32xf32, #tpu.memory_space<vmem>>, %arg8: memref<32x32xf32, #tpu.memory_space<vmem>>, %arg9: memref<1x32xf32, #tpu.memory_space<vmem>>, %arg10: memref<2x32xf32, #tpu.memory_space<vmem>>) attributes {dimension_semantics = [#tpu.dimension_semantics<parallel>], iteration_bounds = array<i64: 1>, scalar_prefetch = 0 : i64, scratch_operands = 0 : i64, tpu.core_type = #tpu.core_type<tc>, window_params = [{transform_indices = @transform_0, window_bounds = array<i64: 16, 32>}, {transform_indices = @transform_1, window_bounds = array<i64: 16, 32>}, {transform_indices = @transform_2, window_bounds = array<i64: 2, 64>}, {pipeline_mode = #tpu.pipeline_mode<synchronous>, transform_indices = @transform_3, window_bounds = array<i64: 32, 32>}, {pipeline_mode = #tpu.pipeline_mode<synchronous>, transform_indices = @transform_4, window_bounds = array<i64: 1, 32>}, {pipeline_mode = #tpu.pipeline_mode<synchronous>, transform_indices = @transform_5, window_bounds = array<i64: 32, 32>}, {pipeline_mode = #tpu.pipeline_mode<synchronous>, transform_indices = @transform_6, window_bounds = array<i64: 1, 32>}, {pipeline_mode = #tpu.pipeline_mode<synchronous>, transform_indices = @transform_7, window_bounds = array<i64: 32, 32>}, {pipeline_mode = #tpu.pipeline_mode<synchronous>, transform_indices = @transform_8, window_bounds = array<i64: 1, 32>}, {transform_indices = @transform_9, window_bounds = array<i64: 2, 32>}]} {
    %c0 = arith.constant 0 : index
    %c0_0 = arith.constant 0 : index
    %0 = vector.load %arg1[%c0, %c0_0] : memref<16x32xf32, #tpu.memory_space<vmem>>, vector<16x32xf32>
    %c0_1 = arith.constant 0 : index
    %c0_2 = arith.constant 0 : index
    %1 = vector.load %arg4[%c0_1, %c0_2] : memref<32x32xf32, #tpu.memory_space<vmem>>, vector<32x32xf32>
    %cst = arith.constant dense<0.000000e+00> : vector<16x32xf32>
    %2 = tpu.matmul %0, %1, %cst {dimension_numbers = #tpu.dot_dimension_numbers<[1], [0], [0], [1], [0, 0, 1, 1], [], []>} : vector<16x32xf32>, vector<32x32xf32>, vector<16x32xf32> -> vector<16x32xf32>
    %c0_3 = arith.constant 0 : index
    %c0_4 = arith.constant 0 : index
    %3 = vector.load %arg5[%c0_3, %c0_4] : memref<1x32xf32, #tpu.memory_space<vmem>>, vector<1x32xf32>
    %4 = vector.broadcast %3 : vector<1x32xf32> to vector<16x32xf32>
    %5 = arith.addf %2, %4 : vector<16x32xf32>
    %cst_5 = arith.constant 0.000000e+00 : f32
    %6 = vector.broadcast %cst_5 : f32 to vector<16x32xf32>
    %7 = arith.maximumf %5, %6 : vector<16x32xf32>
    %c0_6 = arith.constant 0 : index
    %c0_7 = arith.constant 0 : index
    %8 = vector.load %arg2[%c0_6, %c0_7] : memref<16x32xf32, #tpu.memory_space<vmem>>, vector<16x32xf32>
    %c0_8 = arith.constant 0 : index
    %c0_9 = arith.constant 0 : index
    %9 = vector.load %arg6[%c0_8, %c0_9] : memref<32x32xf32, #tpu.memory_space<vmem>>, vector<32x32xf32>
    %cst_10 = arith.constant dense<0.000000e+00> : vector<16x32xf32>
    %10 = tpu.matmul %8, %9, %cst_10 {dimension_numbers = #tpu.dot_dimension_numbers<[1], [0], [0], [1], [0, 0, 1, 1], [], []>} : vector<16x32xf32>, vector<32x32xf32>, vector<16x32xf32> -> vector<16x32xf32>
    %c0_11 = arith.constant 0 : index
    %c0_12 = arith.constant 0 : index
    %11 = vector.load %arg7[%c0_11, %c0_12] : memref<1x32xf32, #tpu.memory_space<vmem>>, vector<1x32xf32>
    %12 = vector.broadcast %11 : vector<1x32xf32> to vector<16x32xf32>
    %13 = arith.addf %10, %12 : vector<16x32xf32>
    %cst_13 = arith.constant 0.000000e+00 : f32
    %14 = vector.broadcast %cst_13 : f32 to vector<16x32xf32>
    %15 = arith.maximumf %13, %14 : vector<16x32xf32>
    %c0_14 = arith.constant 0 : index
    %c0_15 = arith.constant 0 : index
    %16 = vector.load %arg3[%c0_14, %c0_15] : memref<2x64xf32, #tpu.memory_space<vmem>>, vector<2x64xf32>
    %17 = vector.shape_cast %7 : vector<16x32xf32> to vector<2x8x32xf32>
    %18 = vector.shape_cast %15 : vector<16x32xf32> to vector<2x8x32xf32>
    %19 = vector.extract_strided_slice %17 {offsets = [0, 0, 0], sizes = [2, 1, 32], strides = [1, 1, 1]} : vector<2x8x32xf32> to vector<2x1x32xf32>
    %20 = vector.shape_cast %19 : vector<2x1x32xf32> to vector<2x32xf32>
    %21 = vector.extract_strided_slice %17 {offsets = [0, 1, 0], sizes = [2, 1, 32], strides = [1, 1, 1]} : vector<2x8x32xf32> to vector<2x1x32xf32>
    %22 = vector.shape_cast %21 : vector<2x1x32xf32> to vector<2x32xf32>
    %23 = vector.extract_strided_slice %17 {offsets = [0, 2, 0], sizes = [2, 1, 32], strides = [1, 1, 1]} : vector<2x8x32xf32> to vector<2x1x32xf32>
    %24 = vector.shape_cast %23 : vector<2x1x32xf32> to vector<2x32xf32>
    %25 = vector.extract_strided_slice %17 {offsets = [0, 3, 0], sizes = [2, 1, 32], strides = [1, 1, 1]} : vector<2x8x32xf32> to vector<2x1x32xf32>
    %26 = vector.shape_cast %25 : vector<2x1x32xf32> to vector<2x32xf32>
    %27 = vector.extract_strided_slice %17 {offsets = [0, 4, 0], sizes = [2, 1, 32], strides = [1, 1, 1]} : vector<2x8x32xf32> to vector<2x1x32xf32>
    %28 = vector.shape_cast %27 : vector<2x1x32xf32> to vector<2x32xf32>
    %29 = vector.extract_strided_slice %17 {offsets = [0, 5, 0], sizes = [2, 1, 32], strides = [1, 1, 1]} : vector<2x8x32xf32> to vector<2x1x32xf32>
    %30 = vector.shape_cast %29 : vector<2x1x32xf32> to vector<2x32xf32>
    %31 = vector.extract_strided_slice %17 {offsets = [0, 6, 0], sizes = [2, 1, 32], strides = [1, 1, 1]} : vector<2x8x32xf32> to vector<2x1x32xf32>
    %32 = vector.shape_cast %31 : vector<2x1x32xf32> to vector<2x32xf32>
    %33 = vector.extract_strided_slice %17 {offsets = [0, 7, 0], sizes = [2, 1, 32], strides = [1, 1, 1]} : vector<2x8x32xf32> to vector<2x1x32xf32>
    %34 = vector.shape_cast %33 : vector<2x1x32xf32> to vector<2x32xf32>
    %35 = vector.extract_strided_slice %18 {offsets = [0, 0, 0], sizes = [2, 1, 32], strides = [1, 1, 1]} : vector<2x8x32xf32> to vector<2x1x32xf32>
    %36 = vector.shape_cast %35 : vector<2x1x32xf32> to vector<2x32xf32>
    %37 = vector.extract_strided_slice %18 {offsets = [0, 1, 0], sizes = [2, 1, 32], strides = [1, 1, 1]} : vector<2x8x32xf32> to vector<2x1x32xf32>
    %38 = vector.shape_cast %37 : vector<2x1x32xf32> to vector<2x32xf32>
    %39 = vector.extract_strided_slice %18 {offsets = [0, 2, 0], sizes = [2, 1, 32], strides = [1, 1, 1]} : vector<2x8x32xf32> to vector<2x1x32xf32>
    %40 = vector.shape_cast %39 : vector<2x1x32xf32> to vector<2x32xf32>
    %41 = vector.extract_strided_slice %18 {offsets = [0, 3, 0], sizes = [2, 1, 32], strides = [1, 1, 1]} : vector<2x8x32xf32> to vector<2x1x32xf32>
    %42 = vector.shape_cast %41 : vector<2x1x32xf32> to vector<2x32xf32>
    %43 = vector.extract_strided_slice %18 {offsets = [0, 4, 0], sizes = [2, 1, 32], strides = [1, 1, 1]} : vector<2x8x32xf32> to vector<2x1x32xf32>
    %44 = vector.shape_cast %43 : vector<2x1x32xf32> to vector<2x32xf32>
    %45 = vector.extract_strided_slice %18 {offsets = [0, 5, 0], sizes = [2, 1, 32], strides = [1, 1, 1]} : vector<2x8x32xf32> to vector<2x1x32xf32>
    %46 = vector.shape_cast %45 : vector<2x1x32xf32> to vector<2x32xf32>
    %47 = vector.extract_strided_slice %18 {offsets = [0, 6, 0], sizes = [2, 1, 32], strides = [1, 1, 1]} : vector<2x8x32xf32> to vector<2x1x32xf32>
    %48 = vector.shape_cast %47 : vector<2x1x32xf32> to vector<2x32xf32>
    %49 = vector.extract_strided_slice %18 {offsets = [0, 7, 0], sizes = [2, 1, 32], strides = [1, 1, 1]} : vector<2x8x32xf32> to vector<2x1x32xf32>
    %50 = vector.shape_cast %49 : vector<2x1x32xf32> to vector<2x32xf32>
    %cst_16 = arith.constant 0.000000e+00 : f32
    %51 = vector.broadcast %cst_16 : f32 to vector<2x32xf32>
    %52 = vector.extract_strided_slice %16 {offsets = [0, 0], sizes = [2, 1], strides = [1, 1]} : vector<2x64xf32> to vector<2x1xf32>
    %53 = vector.broadcast %52 : vector<2x1xf32> to vector<2x32xf32>
    %54 = arith.mulf %53, %36 : vector<2x32xf32>
    %55 = vector.extract_strided_slice %16 {offsets = [0, 1], sizes = [2, 1], strides = [1, 1]} : vector<2x64xf32> to vector<2x1xf32>
    %56 = vector.broadcast %55 : vector<2x1xf32> to vector<2x32xf32>
    %57 = arith.mulf %56, %38 : vector<2x32xf32>
    %58 = arith.addf %54, %57 : vector<2x32xf32>
    %59 = vector.extract_strided_slice %16 {offsets = [0, 2], sizes = [2, 1], strides = [1, 1]} : vector<2x64xf32> to vector<2x1xf32>
    %60 = vector.broadcast %59 : vector<2x1xf32> to vector<2x32xf32>
    %61 = arith.mulf %60, %40 : vector<2x32xf32>
    %62 = arith.addf %58, %61 : vector<2x32xf32>
    %63 = vector.extract_strided_slice %16 {offsets = [0, 3], sizes = [2, 1], strides = [1, 1]} : vector<2x64xf32> to vector<2x1xf32>
    %64 = vector.broadcast %63 : vector<2x1xf32> to vector<2x32xf32>
    %65 = arith.mulf %64, %42 : vector<2x32xf32>
    %66 = arith.addf %62, %65 : vector<2x32xf32>
    %67 = vector.extract_strided_slice %16 {offsets = [0, 4], sizes = [2, 1], strides = [1, 1]} : vector<2x64xf32> to vector<2x1xf32>
    %68 = vector.broadcast %67 : vector<2x1xf32> to vector<2x32xf32>
    %69 = arith.mulf %68, %44 : vector<2x32xf32>
    %70 = arith.addf %66, %69 : vector<2x32xf32>
    %71 = vector.extract_strided_slice %16 {offsets = [0, 5], sizes = [2, 1], strides = [1, 1]} : vector<2x64xf32> to vector<2x1xf32>
    %72 = vector.broadcast %71 : vector<2x1xf32> to vector<2x32xf32>
    %73 = arith.mulf %72, %46 : vector<2x32xf32>
    %74 = arith.addf %70, %73 : vector<2x32xf32>
    %75 = vector.extract_strided_slice %16 {offsets = [0, 6], sizes = [2, 1], strides = [1, 1]} : vector<2x64xf32> to vector<2x1xf32>
    %76 = vector.broadcast %75 : vector<2x1xf32> to vector<2x32xf32>
    %77 = arith.mulf %76, %48 : vector<2x32xf32>
    %78 = arith.addf %74, %77 : vector<2x32xf32>
    %79 = vector.extract_strided_slice %16 {offsets = [0, 7], sizes = [2, 1], strides = [1, 1]} : vector<2x64xf32> to vector<2x1xf32>
    %80 = vector.broadcast %79 : vector<2x1xf32> to vector<2x32xf32>
    %81 = arith.mulf %80, %50 : vector<2x32xf32>
    %82 = arith.addf %78, %81 : vector<2x32xf32>
    %83 = arith.mulf %20, %82 : vector<2x32xf32>
    %84 = arith.addf %51, %83 : vector<2x32xf32>
    %85 = vector.extract_strided_slice %16 {offsets = [0, 8], sizes = [2, 1], strides = [1, 1]} : vector<2x64xf32> to vector<2x1xf32>
    %86 = vector.broadcast %85 : vector<2x1xf32> to vector<2x32xf32>
    %87 = arith.mulf %86, %36 : vector<2x32xf32>
    %88 = vector.extract_strided_slice %16 {offsets = [0, 9], sizes = [2, 1], strides = [1, 1]} : vector<2x64xf32> to vector<2x1xf32>
    %89 = vector.broadcast %88 : vector<2x1xf32> to vector<2x32xf32>
    %90 = arith.mulf %89, %38 : vector<2x32xf32>
    %91 = arith.addf %87, %90 : vector<2x32xf32>
    %92 = vector.extract_strided_slice %16 {offsets = [0, 10], sizes = [2, 1], strides = [1, 1]} : vector<2x64xf32> to vector<2x1xf32>
    %93 = vector.broadcast %92 : vector<2x1xf32> to vector<2x32xf32>
    %94 = arith.mulf %93, %40 : vector<2x32xf32>
    %95 = arith.addf %91, %94 : vector<2x32xf32>
    %96 = vector.extract_strided_slice %16 {offsets = [0, 11], sizes = [2, 1], strides = [1, 1]} : vector<2x64xf32> to vector<2x1xf32>
    %97 = vector.broadcast %96 : vector<2x1xf32> to vector<2x32xf32>
    %98 = arith.mulf %97, %42 : vector<2x32xf32>
    %99 = arith.addf %95, %98 : vector<2x32xf32>
    %100 = vector.extract_strided_slice %16 {offsets = [0, 12], sizes = [2, 1], strides = [1, 1]} : vector<2x64xf32> to vector<2x1xf32>
    %101 = vector.broadcast %100 : vector<2x1xf32> to vector<2x32xf32>
    %102 = arith.mulf %101, %44 : vector<2x32xf32>
    %103 = arith.addf %99, %102 : vector<2x32xf32>
    %104 = vector.extract_strided_slice %16 {offsets = [0, 13], sizes = [2, 1], strides = [1, 1]} : vector<2x64xf32> to vector<2x1xf32>
    %105 = vector.broadcast %104 : vector<2x1xf32> to vector<2x32xf32>
    %106 = arith.mulf %105, %46 : vector<2x32xf32>
    %107 = arith.addf %103, %106 : vector<2x32xf32>
    %108 = vector.extract_strided_slice %16 {offsets = [0, 14], sizes = [2, 1], strides = [1, 1]} : vector<2x64xf32> to vector<2x1xf32>
    %109 = vector.broadcast %108 : vector<2x1xf32> to vector<2x32xf32>
    %110 = arith.mulf %109, %48 : vector<2x32xf32>
    %111 = arith.addf %107, %110 : vector<2x32xf32>
    %112 = vector.extract_strided_slice %16 {offsets = [0, 15], sizes = [2, 1], strides = [1, 1]} : vector<2x64xf32> to vector<2x1xf32>
    %113 = vector.broadcast %112 : vector<2x1xf32> to vector<2x32xf32>
    %114 = arith.mulf %113, %50 : vector<2x32xf32>
    %115 = arith.addf %111, %114 : vector<2x32xf32>
    %116 = arith.mulf %22, %115 : vector<2x32xf32>
    %117 = arith.addf %84, %116 : vector<2x32xf32>
    %118 = vector.extract_strided_slice %16 {offsets = [0, 16], sizes = [2, 1], strides = [1, 1]} : vector<2x64xf32> to vector<2x1xf32>
    %119 = vector.broadcast %118 : vector<2x1xf32> to vector<2x32xf32>
    %120 = arith.mulf %119, %36 : vector<2x32xf32>
    %121 = vector.extract_strided_slice %16 {offsets = [0, 17], sizes = [2, 1], strides = [1, 1]} : vector<2x64xf32> to vector<2x1xf32>
    %122 = vector.broadcast %121 : vector<2x1xf32> to vector<2x32xf32>
    %123 = arith.mulf %122, %38 : vector<2x32xf32>
    %124 = arith.addf %120, %123 : vector<2x32xf32>
    %125 = vector.extract_strided_slice %16 {offsets = [0, 18], sizes = [2, 1], strides = [1, 1]} : vector<2x64xf32> to vector<2x1xf32>
    %126 = vector.broadcast %125 : vector<2x1xf32> to vector<2x32xf32>
    %127 = arith.mulf %126, %40 : vector<2x32xf32>
    %128 = arith.addf %124, %127 : vector<2x32xf32>
    %129 = vector.extract_strided_slice %16 {offsets = [0, 19], sizes = [2, 1], strides = [1, 1]} : vector<2x64xf32> to vector<2x1xf32>
    %130 = vector.broadcast %129 : vector<2x1xf32> to vector<2x32xf32>
    %131 = arith.mulf %130, %42 : vector<2x32xf32>
    %132 = arith.addf %128, %131 : vector<2x32xf32>
    %133 = vector.extract_strided_slice %16 {offsets = [0, 20], sizes = [2, 1], strides = [1, 1]} : vector<2x64xf32> to vector<2x1xf32>
    %134 = vector.broadcast %133 : vector<2x1xf32> to vector<2x32xf32>
    %135 = arith.mulf %134, %44 : vector<2x32xf32>
    %136 = arith.addf %132, %135 : vector<2x32xf32>
    %137 = vector.extract_strided_slice %16 {offsets = [0, 21], sizes = [2, 1], strides = [1, 1]} : vector<2x64xf32> to vector<2x1xf32>
    %138 = vector.broadcast %137 : vector<2x1xf32> to vector<2x32xf32>
    %139 = arith.mulf %138, %46 : vector<2x32xf32>
    %140 = arith.addf %136, %139 : vector<2x32xf32>
    %141 = vector.extract_strided_slice %16 {offsets = [0, 22], sizes = [2, 1], strides = [1, 1]} : vector<2x64xf32> to vector<2x1xf32>
    %142 = vector.broadcast %141 : vector<2x1xf32> to vector<2x32xf32>
    %143 = arith.mulf %142, %48 : vector<2x32xf32>
    %144 = arith.addf %140, %143 : vector<2x32xf32>
    %145 = vector.extract_strided_slice %16 {offsets = [0, 23], sizes = [2, 1], strides = [1, 1]} : vector<2x64xf32> to vector<2x1xf32>
    %146 = vector.broadcast %145 : vector<2x1xf32> to vector<2x32xf32>
    %147 = arith.mulf %146, %50 : vector<2x32xf32>
    %148 = arith.addf %144, %147 : vector<2x32xf32>
    %149 = arith.mulf %24, %148 : vector<2x32xf32>
    %150 = arith.addf %117, %149 : vector<2x32xf32>
    %151 = vector.extract_strided_slice %16 {offsets = [0, 24], sizes = [2, 1], strides = [1, 1]} : vector<2x64xf32> to vector<2x1xf32>
    %152 = vector.broadcast %151 : vector<2x1xf32> to vector<2x32xf32>
    %153 = arith.mulf %152, %36 : vector<2x32xf32>
    %154 = vector.extract_strided_slice %16 {offsets = [0, 25], sizes = [2, 1], strides = [1, 1]} : vector<2x64xf32> to vector<2x1xf32>
    %155 = vector.broadcast %154 : vector<2x1xf32> to vector<2x32xf32>
    %156 = arith.mulf %155, %38 : vector<2x32xf32>
    %157 = arith.addf %153, %156 : vector<2x32xf32>
    %158 = vector.extract_strided_slice %16 {offsets = [0, 26], sizes = [2, 1], strides = [1, 1]} : vector<2x64xf32> to vector<2x1xf32>
    %159 = vector.broadcast %158 : vector<2x1xf32> to vector<2x32xf32>
    %160 = arith.mulf %159, %40 : vector<2x32xf32>
    %161 = arith.addf %157, %160 : vector<2x32xf32>
    %162 = vector.extract_strided_slice %16 {offsets = [0, 27], sizes = [2, 1], strides = [1, 1]} : vector<2x64xf32> to vector<2x1xf32>
    %163 = vector.broadcast %162 : vector<2x1xf32> to vector<2x32xf32>
    %164 = arith.mulf %163, %42 : vector<2x32xf32>
    %165 = arith.addf %161, %164 : vector<2x32xf32>
    %166 = vector.extract_strided_slice %16 {offsets = [0, 28], sizes = [2, 1], strides = [1, 1]} : vector<2x64xf32> to vector<2x1xf32>
    %167 = vector.broadcast %166 : vector<2x1xf32> to vector<2x32xf32>
    %168 = arith.mulf %167, %44 : vector<2x32xf32>
    %169 = arith.addf %165, %168 : vector<2x32xf32>
    %170 = vector.extract_strided_slice %16 {offsets = [0, 29], sizes = [2, 1], strides = [1, 1]} : vector<2x64xf32> to vector<2x1xf32>
    %171 = vector.broadcast %170 : vector<2x1xf32> to vector<2x32xf32>
    %172 = arith.mulf %171, %46 : vector<2x32xf32>
    %173 = arith.addf %169, %172 : vector<2x32xf32>
    %174 = vector.extract_strided_slice %16 {offsets = [0, 30], sizes = [2, 1], strides = [1, 1]} : vector<2x64xf32> to vector<2x1xf32>
    %175 = vector.broadcast %174 : vector<2x1xf32> to vector<2x32xf32>
    %176 = arith.mulf %175, %48 : vector<2x32xf32>
    %177 = arith.addf %173, %176 : vector<2x32xf32>
    %178 = vector.extract_strided_slice %16 {offsets = [0, 31], sizes = [2, 1], strides = [1, 1]} : vector<2x64xf32> to vector<2x1xf32>
    %179 = vector.broadcast %178 : vector<2x1xf32> to vector<2x32xf32>
    %180 = arith.mulf %179, %50 : vector<2x32xf32>
    %181 = arith.addf %177, %180 : vector<2x32xf32>
    %182 = arith.mulf %26, %181 : vector<2x32xf32>
    %183 = arith.addf %150, %182 : vector<2x32xf32>
    %184 = vector.extract_strided_slice %16 {offsets = [0, 32], sizes = [2, 1], strides = [1, 1]} : vector<2x64xf32> to vector<2x1xf32>
    %185 = vector.broadcast %184 : vector<2x1xf32> to vector<2x32xf32>
    %186 = arith.mulf %185, %36 : vector<2x32xf32>
    %187 = vector.extract_strided_slice %16 {offsets = [0, 33], sizes = [2, 1], strides = [1, 1]} : vector<2x64xf32> to vector<2x1xf32>
    %188 = vector.broadcast %187 : vector<2x1xf32> to vector<2x32xf32>
    %189 = arith.mulf %188, %38 : vector<2x32xf32>
    %190 = arith.addf %186, %189 : vector<2x32xf32>
    %191 = vector.extract_strided_slice %16 {offsets = [0, 34], sizes = [2, 1], strides = [1, 1]} : vector<2x64xf32> to vector<2x1xf32>
    %192 = vector.broadcast %191 : vector<2x1xf32> to vector<2x32xf32>
    %193 = arith.mulf %192, %40 : vector<2x32xf32>
    %194 = arith.addf %190, %193 : vector<2x32xf32>
    %195 = vector.extract_strided_slice %16 {offsets = [0, 35], sizes = [2, 1], strides = [1, 1]} : vector<2x64xf32> to vector<2x1xf32>
    %196 = vector.broadcast %195 : vector<2x1xf32> to vector<2x32xf32>
    %197 = arith.mulf %196, %42 : vector<2x32xf32>
    %198 = arith.addf %194, %197 : vector<2x32xf32>
    %199 = vector.extract_strided_slice %16 {offsets = [0, 36], sizes = [2, 1], strides = [1, 1]} : vector<2x64xf32> to vector<2x1xf32>
    %200 = vector.broadcast %199 : vector<2x1xf32> to vector<2x32xf32>
    %201 = arith.mulf %200, %44 : vector<2x32xf32>
    %202 = arith.addf %198, %201 : vector<2x32xf32>
    %203 = vector.extract_strided_slice %16 {offsets = [0, 37], sizes = [2, 1], strides = [1, 1]} : vector<2x64xf32> to vector<2x1xf32>
    %204 = vector.broadcast %203 : vector<2x1xf32> to vector<2x32xf32>
    %205 = arith.mulf %204, %46 : vector<2x32xf32>
    %206 = arith.addf %202, %205 : vector<2x32xf32>
    %207 = vector.extract_strided_slice %16 {offsets = [0, 38], sizes = [2, 1], strides = [1, 1]} : vector<2x64xf32> to vector<2x1xf32>
    %208 = vector.broadcast %207 : vector<2x1xf32> to vector<2x32xf32>
    %209 = arith.mulf %208, %48 : vector<2x32xf32>
    %210 = arith.addf %206, %209 : vector<2x32xf32>
    %211 = vector.extract_strided_slice %16 {offsets = [0, 39], sizes = [2, 1], strides = [1, 1]} : vector<2x64xf32> to vector<2x1xf32>
    %212 = vector.broadcast %211 : vector<2x1xf32> to vector<2x32xf32>
    %213 = arith.mulf %212, %50 : vector<2x32xf32>
    %214 = arith.addf %210, %213 : vector<2x32xf32>
    %215 = arith.mulf %28, %214 : vector<2x32xf32>
    %216 = arith.addf %183, %215 : vector<2x32xf32>
    %217 = vector.extract_strided_slice %16 {offsets = [0, 40], sizes = [2, 1], strides = [1, 1]} : vector<2x64xf32> to vector<2x1xf32>
    %218 = vector.broadcast %217 : vector<2x1xf32> to vector<2x32xf32>
    %219 = arith.mulf %218, %36 : vector<2x32xf32>
    %220 = vector.extract_strided_slice %16 {offsets = [0, 41], sizes = [2, 1], strides = [1, 1]} : vector<2x64xf32> to vector<2x1xf32>
    %221 = vector.broadcast %220 : vector<2x1xf32> to vector<2x32xf32>
    %222 = arith.mulf %221, %38 : vector<2x32xf32>
    %223 = arith.addf %219, %222 : vector<2x32xf32>
    %224 = vector.extract_strided_slice %16 {offsets = [0, 42], sizes = [2, 1], strides = [1, 1]} : vector<2x64xf32> to vector<2x1xf32>
    %225 = vector.broadcast %224 : vector<2x1xf32> to vector<2x32xf32>
    %226 = arith.mulf %225, %40 : vector<2x32xf32>
    %227 = arith.addf %223, %226 : vector<2x32xf32>
    %228 = vector.extract_strided_slice %16 {offsets = [0, 43], sizes = [2, 1], strides = [1, 1]} : vector<2x64xf32> to vector<2x1xf32>
    %229 = vector.broadcast %228 : vector<2x1xf32> to vector<2x32xf32>
    %230 = arith.mulf %229, %42 : vector<2x32xf32>
    %231 = arith.addf %227, %230 : vector<2x32xf32>
    %232 = vector.extract_strided_slice %16 {offsets = [0, 44], sizes = [2, 1], strides = [1, 1]} : vector<2x64xf32> to vector<2x1xf32>
    %233 = vector.broadcast %232 : vector<2x1xf32> to vector<2x32xf32>
    %234 = arith.mulf %233, %44 : vector<2x32xf32>
    %235 = arith.addf %231, %234 : vector<2x32xf32>
    %236 = vector.extract_strided_slice %16 {offsets = [0, 45], sizes = [2, 1], strides = [1, 1]} : vector<2x64xf32> to vector<2x1xf32>
    %237 = vector.broadcast %236 : vector<2x1xf32> to vector<2x32xf32>
    %238 = arith.mulf %237, %46 : vector<2x32xf32>
    %239 = arith.addf %235, %238 : vector<2x32xf32>
    %240 = vector.extract_strided_slice %16 {offsets = [0, 46], sizes = [2, 1], strides = [1, 1]} : vector<2x64xf32> to vector<2x1xf32>
    %241 = vector.broadcast %240 : vector<2x1xf32> to vector<2x32xf32>
    %242 = arith.mulf %241, %48 : vector<2x32xf32>
    %243 = arith.addf %239, %242 : vector<2x32xf32>
    %244 = vector.extract_strided_slice %16 {offsets = [0, 47], sizes = [2, 1], strides = [1, 1]} : vector<2x64xf32> to vector<2x1xf32>
    %245 = vector.broadcast %244 : vector<2x1xf32> to vector<2x32xf32>
    %246 = arith.mulf %245, %50 : vector<2x32xf32>
    %247 = arith.addf %243, %246 : vector<2x32xf32>
    %248 = arith.mulf %30, %247 : vector<2x32xf32>
    %249 = arith.addf %216, %248 : vector<2x32xf32>
    %250 = vector.extract_strided_slice %16 {offsets = [0, 48], sizes = [2, 1], strides = [1, 1]} : vector<2x64xf32> to vector<2x1xf32>
    %251 = vector.broadcast %250 : vector<2x1xf32> to vector<2x32xf32>
    %252 = arith.mulf %251, %36 : vector<2x32xf32>
    %253 = vector.extract_strided_slice %16 {offsets = [0, 49], sizes = [2, 1], strides = [1, 1]} : vector<2x64xf32> to vector<2x1xf32>
    %254 = vector.broadcast %253 : vector<2x1xf32> to vector<2x32xf32>
    %255 = arith.mulf %254, %38 : vector<2x32xf32>
    %256 = arith.addf %252, %255 : vector<2x32xf32>
    %257 = vector.extract_strided_slice %16 {offsets = [0, 50], sizes = [2, 1], strides = [1, 1]} : vector<2x64xf32> to vector<2x1xf32>
    %258 = vector.broadcast %257 : vector<2x1xf32> to vector<2x32xf32>
    %259 = arith.mulf %258, %40 : vector<2x32xf32>
    %260 = arith.addf %256, %259 : vector<2x32xf32>
    %261 = vector.extract_strided_slice %16 {offsets = [0, 51], sizes = [2, 1], strides = [1, 1]} : vector<2x64xf32> to vector<2x1xf32>
    %262 = vector.broadcast %261 : vector<2x1xf32> to vector<2x32xf32>
    %263 = arith.mulf %262, %42 : vector<2x32xf32>
    %264 = arith.addf %260, %263 : vector<2x32xf32>
    %265 = vector.extract_strided_slice %16 {offsets = [0, 52], sizes = [2, 1], strides = [1, 1]} : vector<2x64xf32> to vector<2x1xf32>
    %266 = vector.broadcast %265 : vector<2x1xf32> to vector<2x32xf32>
    %267 = arith.mulf %266, %44 : vector<2x32xf32>
    %268 = arith.addf %264, %267 : vector<2x32xf32>
    %269 = vector.extract_strided_slice %16 {offsets = [0, 53], sizes = [2, 1], strides = [1, 1]} : vector<2x64xf32> to vector<2x1xf32>
    %270 = vector.broadcast %269 : vector<2x1xf32> to vector<2x32xf32>
    %271 = arith.mulf %270, %46 : vector<2x32xf32>
    %272 = arith.addf %268, %271 : vector<2x32xf32>
    %273 = vector.extract_strided_slice %16 {offsets = [0, 54], sizes = [2, 1], strides = [1, 1]} : vector<2x64xf32> to vector<2x1xf32>
    %274 = vector.broadcast %273 : vector<2x1xf32> to vector<2x32xf32>
    %275 = arith.mulf %274, %48 : vector<2x32xf32>
    %276 = arith.addf %272, %275 : vector<2x32xf32>
    %277 = vector.extract_strided_slice %16 {offsets = [0, 55], sizes = [2, 1], strides = [1, 1]} : vector<2x64xf32> to vector<2x1xf32>
    %278 = vector.broadcast %277 : vector<2x1xf32> to vector<2x32xf32>
    %279 = arith.mulf %278, %50 : vector<2x32xf32>
    %280 = arith.addf %276, %279 : vector<2x32xf32>
    %281 = arith.mulf %32, %280 : vector<2x32xf32>
    %282 = arith.addf %249, %281 : vector<2x32xf32>
    %283 = vector.extract_strided_slice %16 {offsets = [0, 56], sizes = [2, 1], strides = [1, 1]} : vector<2x64xf32> to vector<2x1xf32>
    %284 = vector.broadcast %283 : vector<2x1xf32> to vector<2x32xf32>
    %285 = arith.mulf %284, %36 : vector<2x32xf32>
    %286 = vector.extract_strided_slice %16 {offsets = [0, 57], sizes = [2, 1], strides = [1, 1]} : vector<2x64xf32> to vector<2x1xf32>
    %287 = vector.broadcast %286 : vector<2x1xf32> to vector<2x32xf32>
    %288 = arith.mulf %287, %38 : vector<2x32xf32>
    %289 = arith.addf %285, %288 : vector<2x32xf32>
    %290 = vector.extract_strided_slice %16 {offsets = [0, 58], sizes = [2, 1], strides = [1, 1]} : vector<2x64xf32> to vector<2x1xf32>
    %291 = vector.broadcast %290 : vector<2x1xf32> to vector<2x32xf32>
    %292 = arith.mulf %291, %40 : vector<2x32xf32>
    %293 = arith.addf %289, %292 : vector<2x32xf32>
    %294 = vector.extract_strided_slice %16 {offsets = [0, 59], sizes = [2, 1], strides = [1, 1]} : vector<2x64xf32> to vector<2x1xf32>
    %295 = vector.broadcast %294 : vector<2x1xf32> to vector<2x32xf32>
    %296 = arith.mulf %295, %42 : vector<2x32xf32>
    %297 = arith.addf %293, %296 : vector<2x32xf32>
    %298 = vector.extract_strided_slice %16 {offsets = [0, 60], sizes = [2, 1], strides = [1, 1]} : vector<2x64xf32> to vector<2x1xf32>
    %299 = vector.broadcast %298 : vector<2x1xf32> to vector<2x32xf32>
    %300 = arith.mulf %299, %44 : vector<2x32xf32>
    %301 = arith.addf %297, %300 : vector<2x32xf32>
    %302 = vector.extract_strided_slice %16 {offsets = [0, 61], sizes = [2, 1], strides = [1, 1]} : vector<2x64xf32> to vector<2x1xf32>
    %303 = vector.broadcast %302 : vector<2x1xf32> to vector<2x32xf32>
    %304 = arith.mulf %303, %46 : vector<2x32xf32>
    %305 = arith.addf %301, %304 : vector<2x32xf32>
    %306 = vector.extract_strided_slice %16 {offsets = [0, 62], sizes = [2, 1], strides = [1, 1]} : vector<2x64xf32> to vector<2x1xf32>
    %307 = vector.broadcast %306 : vector<2x1xf32> to vector<2x32xf32>
    %308 = arith.mulf %307, %48 : vector<2x32xf32>
    %309 = arith.addf %305, %308 : vector<2x32xf32>
    %310 = vector.extract_strided_slice %16 {offsets = [0, 63], sizes = [2, 1], strides = [1, 1]} : vector<2x64xf32> to vector<2x1xf32>
    %311 = vector.broadcast %310 : vector<2x1xf32> to vector<2x32xf32>
    %312 = arith.mulf %311, %50 : vector<2x32xf32>
    %313 = arith.addf %309, %312 : vector<2x32xf32>
    %314 = arith.mulf %34, %313 : vector<2x32xf32>
    %315 = arith.addf %282, %314 : vector<2x32xf32>
    %c0_17 = arith.constant 0 : index
    %c0_18 = arith.constant 0 : index
    %316 = vector.load %arg8[%c0_17, %c0_18] : memref<32x32xf32, #tpu.memory_space<vmem>>, vector<32x32xf32>
    %cst_19 = arith.constant dense<0.000000e+00> : vector<2x32xf32>
    %317 = tpu.matmul %315, %316, %cst_19 {dimension_numbers = #tpu.dot_dimension_numbers<[1], [0], [0], [1], [0, 0, 1, 1], [], []>} : vector<2x32xf32>, vector<32x32xf32>, vector<2x32xf32> -> vector<2x32xf32>
    %c0_20 = arith.constant 0 : index
    %c0_21 = arith.constant 0 : index
    %318 = vector.load %arg9[%c0_20, %c0_21] : memref<1x32xf32, #tpu.memory_space<vmem>>, vector<1x32xf32>
    %319 = vector.broadcast %318 : vector<1x32xf32> to vector<2x32xf32>
    %320 = arith.addf %317, %319 : vector<2x32xf32>
    %c0_22 = arith.constant 0 : index
    %c0_23 = arith.constant 0 : index
    %321 = vector.load %arg10[%c0_22, %c0_23] : memref<2x32xf32, #tpu.memory_space<vmem>>, vector<2x32xf32>
    tpu.vector_store %arg10[%c0_22, %c0_23], %320 {strides = array<i32>} : memref<2x32xf32, #tpu.memory_space<vmem>>, vector<2x32xf32>,
    return
  }
  func.func @transform_0(%arg0: i32) -> (i32, i32) {
    %c0_i32 = arith.constant 0 : i32
    %c0_i32_0 = arith.constant 0 : i32
    return %arg0, %c0_i32 : i32, i32
  }
  func.func @transform_1(%arg0: i32) -> (i32, i32) {
    %c0_i32 = arith.constant 0 : i32
    %c0_i32_0 = arith.constant 0 : i32
    return %arg0, %c0_i32 : i32, i32
  }
  func.func @transform_2(%arg0: i32) -> (i32, i32) {
    %c0_i32 = arith.constant 0 : i32
    %c0_i32_0 = arith.constant 0 : i32
    return %arg0, %c0_i32 : i32, i32
  }
  func.func @transform_3(%arg0: i32) -> (i32, i32) {
    %c0_i32 = arith.constant 0 : i32
    %c0_i32_0 = arith.constant 0 : i32
    %c0_i32_1 = arith.constant 0 : i32
    return %c0_i32, %c0_i32_0 : i32, i32
  }
  func.func @transform_4(%arg0: i32) -> (i32, i32) {
    %c0_i32 = arith.constant 0 : i32
    %c0_i32_0 = arith.constant 0 : i32
    %c0_i32_1 = arith.constant 0 : i32
    return %c0_i32, %c0_i32_0 : i32, i32
  }
  func.func @transform_5(%arg0: i32) -> (i32, i32) {
    %c0_i32 = arith.constant 0 : i32
    %c0_i32_0 = arith.constant 0 : i32
    %c0_i32_1 = arith.constant 0 : i32
    return %c0_i32, %c0_i32_0 : i32, i32
  }
  func.func @transform_6(%arg0: i32) -> (i32, i32) {
    %c0_i32 = arith.constant 0 : i32
    %c0_i32_0 = arith.constant 0 : i32
    %c0_i32_1 = arith.constant 0 : i32
    return %c0_i32, %c0_i32_0 : i32, i32
  }
  func.func @transform_7(%arg0: i32) -> (i32, i32) {
    %c0_i32 = arith.constant 0 : i32
    %c0_i32_0 = arith.constant 0 : i32
    %c0_i32_1 = arith.constant 0 : i32
    return %c0_i32, %c0_i32_0 : i32, i32
  }
  func.func @transform_8(%arg0: i32) -> (i32, i32) {
    %c0_i32 = arith.constant 0 : i32
    %c0_i32_0 = arith.constant 0 : i32
    %c0_i32_1 = arith.constant 0 : i32
    return %c0_i32, %c0_i32_0 : i32, i32
  }
  func.func @transform_9(%arg0: i32) -> (i32, i32) {
    %c0_i32 = arith.constant 0 : i32
    %c0_i32_0 = arith.constant 0 : i32
    return %arg0, %c0_i32 : i32, i32
  }
}

module attributes {stable_mosaic.version = 11 : i64} {
  func.func @_apply_single_attention_kernel(%arg0: i32, %arg1: memref<16x32xf32, #tpu.memory_space<vmem>>, %arg2: memref<16x32xf32, #tpu.memory_space<vmem>>, %arg3: memref<2x64xf32, #tpu.memory_space<vmem>>, %arg4: memref<32x32xf32, #tpu.memory_space<vmem>>, %arg5: memref<1x32xf32, #tpu.memory_space<vmem>>, %arg6: memref<32x32xf32, #tpu.memory_space<vmem>>, %arg7: memref<1x32xf32, #tpu.memory_space<vmem>>, %arg8: memref<32x32xf32, #tpu.memory_space<vmem>>, %arg9: memref<1x32xf32, #tpu.memory_space<vmem>>, %arg10: memref<2x32xf32, #tpu.memory_space<vmem>>) attributes {dimension_semantics = [#tpu.dimension_semantics<parallel>], iteration_bounds = array<i64: 1>, scalar_prefetch = 0 : i64, scratch_operands = 0 : i64, tpu.core_type = #tpu.core_type<tc>, window_params = [{transform_indices = @transform_0, window_bounds = array<i64: 16, 32>}, {transform_indices = @transform_1, window_bounds = array<i64: 16, 32>}, {transform_indices = @transform_2, window_bounds = array<i64: 2, 64>}, {pipeline_mode = #tpu.pipeline_mode<synchronous>, transform_indices = @transform_3, window_bounds = array<i64: 32, 32>}, {pipeline_mode = #tpu.pipeline_mode<synchronous>, transform_indices = @transform_4, window_bounds = array<i64: 1, 32>}, {pipeline_mode = #tpu.pipeline_mode<synchronous>, transform_indices = @transform_5, window_bounds = array<i64: 32, 32>}, {pipeline_mode = #tpu.pipeline_mode<synchronous>, transform_indices = @transform_6, window_bounds = array<i64: 1, 32>}, {pipeline_mode = #tpu.pipeline_mode<synchronous>, transform_indices = @transform_7, window_bounds = array<i64: 32, 32>}, {pipeline_mode = #tpu.pipeline_mode<synchronous>, transform_indices = @transform_8, window_bounds = array<i64: 1, 32>}, {transform_indices = @transform_9, window_bounds = array<i64: 2, 32>}]} {
    %c0 = arith.constant 0 : index
    %c0_0 = arith.constant 0 : index
    %0 = vector.load %arg1[%c0, %c0_0] : memref<16x32xf32, #tpu.memory_space<vmem>>, vector<16x32xf32>
    %c0_1 = arith.constant 0 : index
    %c0_2 = arith.constant 0 : index
    %1 = vector.load %arg4[%c0_1, %c0_2] : memref<32x32xf32, #tpu.memory_space<vmem>>, vector<32x32xf32>
    %cst = arith.constant dense<0.000000e+00> : vector<16x32xf32>
    %2 = tpu.matmul %0, %1, %cst {dimension_numbers = #tpu.dot_dimension_numbers<[1], [0], [0], [1], [0, 0, 1, 1], [], []>} : vector<16x32xf32>, vector<32x32xf32>, vector<16x32xf32> -> vector<16x32xf32>
    %c0_3 = arith.constant 0 : index
    %c0_4 = arith.constant 0 : index
    %3 = vector.load %arg5[%c0_3, %c0_4] : memref<1x32xf32, #tpu.memory_space<vmem>>, vector<1x32xf32>
    %4 = vector.broadcast %3 : vector<1x32xf32> to vector<16x32xf32>
    %5 = arith.addf %2, %4 : vector<16x32xf32>
    %cst_5 = arith.constant 0.000000e+00 : f32
    %6 = vector.broadcast %cst_5 : f32 to vector<16x32xf32>
    %7 = arith.maximumf %5, %6 : vector<16x32xf32>
    %c0_6 = arith.constant 0 : index
    %c0_7 = arith.constant 0 : index
    %8 = vector.load %arg2[%c0_6, %c0_7] : memref<16x32xf32, #tpu.memory_space<vmem>>, vector<16x32xf32>
    %c0_8 = arith.constant 0 : index
    %c0_9 = arith.constant 0 : index
    %9 = vector.load %arg6[%c0_8, %c0_9] : memref<32x32xf32, #tpu.memory_space<vmem>>, vector<32x32xf32>
    %cst_10 = arith.constant dense<0.000000e+00> : vector<16x32xf32>
    %10 = tpu.matmul %8, %9, %cst_10 {dimension_numbers = #tpu.dot_dimension_numbers<[1], [0], [0], [1], [0, 0, 1, 1], [], []>} : vector<16x32xf32>, vector<32x32xf32>, vector<16x32xf32> -> vector<16x32xf32>
    %c0_11 = arith.constant 0 : index
    %c0_12 = arith.constant 0 : index
    %11 = vector.load %arg7[%c0_11, %c0_12] : memref<1x32xf32, #tpu.memory_space<vmem>>, vector<1x32xf32>
    %12 = vector.broadcast %11 : vector<1x32xf32> to vector<16x32xf32>
    %13 = arith.addf %10, %12 : vector<16x32xf32>
    %cst_13 = arith.constant 0.000000e+00 : f32
    %14 = vector.broadcast %cst_13 : f32 to vector<16x32xf32>
    %15 = arith.maximumf %13, %14 : vector<16x32xf32>
    %c0_14 = arith.constant 0 : index
    %c0_15 = arith.constant 0 : index
    %16 = vector.load %arg3[%c0_14, %c0_15] : memref<2x64xf32, #tpu.memory_space<vmem>>, vector<2x64xf32>
    %17 = vector.shape_cast %7 : vector<16x32xf32> to vector<2x8x32xf32>
    %18 = vector.shape_cast %15 : vector<16x32xf32> to vector<2x8x32xf32>
    %19 = vector.extract_strided_slice %17 {offsets = [0, 0, 0], sizes = [2, 1, 32], strides = [1, 1, 1]} : vector<2x8x32xf32> to vector<2x1x32xf32>
    %20 = vector.shape_cast %19 : vector<2x1x32xf32> to vector<2x32xf32>
    %21 = vector.extract_strided_slice %17 {offsets = [0, 1, 0], sizes = [2, 1, 32], strides = [1, 1, 1]} : vector<2x8x32xf32> to vector<2x1x32xf32>
    %22 = vector.shape_cast %21 : vector<2x1x32xf32> to vector<2x32xf32>
    %23 = vector.extract_strided_slice %17 {offsets = [0, 2, 0], sizes = [2, 1, 32], strides = [1, 1, 1]} : vector<2x8x32xf32> to vector<2x1x32xf32>
    %24 = vector.shape_cast %23 : vector<2x1x32xf32> to vector<2x32xf32>
    %25 = vector.extract_strided_slice %17 {offsets = [0, 3, 0], sizes = [2, 1, 32], strides = [1, 1, 1]} : vector<2x8x32xf32> to vector<2x1x32xf32>
    %26 = vector.shape_cast %25 : vector<2x1x32xf32> to vector<2x32xf32>
    %27 = vector.extract_strided_slice %17 {offsets = [0, 4, 0], sizes = [2, 1, 32], strides = [1, 1, 1]} : vector<2x8x32xf32> to vector<2x1x32xf32>
    %28 = vector.shape_cast %27 : vector<2x1x32xf32> to vector<2x32xf32>
    %29 = vector.extract_strided_slice %17 {offsets = [0, 5, 0], sizes = [2, 1, 32], strides = [1, 1, 1]} : vector<2x8x32xf32> to vector<2x1x32xf32>
    %30 = vector.shape_cast %29 : vector<2x1x32xf32> to vector<2x32xf32>
    %31 = vector.extract_strided_slice %17 {offsets = [0, 6, 0], sizes = [2, 1, 32], strides = [1, 1, 1]} : vector<2x8x32xf32> to vector<2x1x32xf32>
    %32 = vector.shape_cast %31 : vector<2x1x32xf32> to vector<2x32xf32>
    %33 = vector.extract_strided_slice %17 {offsets = [0, 7, 0], sizes = [2, 1, 32], strides = [1, 1, 1]} : vector<2x8x32xf32> to vector<2x1x32xf32>
    %34 = vector.shape_cast %33 : vector<2x1x32xf32> to vector<2x32xf32>
    %35 = vector.extract_strided_slice %18 {offsets = [0, 0, 0], sizes = [2, 1, 32], strides = [1, 1, 1]} : vector<2x8x32xf32> to vector<2x1x32xf32>
    %36 = vector.shape_cast %35 : vector<2x1x32xf32> to vector<2x32xf32>
    %37 = vector.extract_strided_slice %18 {offsets = [0, 1, 0], sizes = [2, 1, 32], strides = [1, 1, 1]} : vector<2x8x32xf32> to vector<2x1x32xf32>
    %38 = vector.shape_cast %37 : vector<2x1x32xf32> to vector<2x32xf32>
    %39 = vector.extract_strided_slice %18 {offsets = [0, 2, 0], sizes = [2, 1, 32], strides = [1, 1, 1]} : vector<2x8x32xf32> to vector<2x1x32xf32>
    %40 = vector.shape_cast %39 : vector<2x1x32xf32> to vector<2x32xf32>
    %41 = vector.extract_strided_slice %18 {offsets = [0, 3, 0], sizes = [2, 1, 32], strides = [1, 1, 1]} : vector<2x8x32xf32> to vector<2x1x32xf32>
    %42 = vector.shape_cast %41 : vector<2x1x32xf32> to vector<2x32xf32>
    %43 = vector.extract_strided_slice %18 {offsets = [0, 4, 0], sizes = [2, 1, 32], strides = [1, 1, 1]} : vector<2x8x32xf32> to vector<2x1x32xf32>
    %44 = vector.shape_cast %43 : vector<2x1x32xf32> to vector<2x32xf32>
    %45 = vector.extract_strided_slice %18 {offsets = [0, 5, 0], sizes = [2, 1, 32], strides = [1, 1, 1]} : vector<2x8x32xf32> to vector<2x1x32xf32>
    %46 = vector.shape_cast %45 : vector<2x1x32xf32> to vector<2x32xf32>
    %47 = vector.extract_strided_slice %18 {offsets = [0, 6, 0], sizes = [2, 1, 32], strides = [1, 1, 1]} : vector<2x8x32xf32> to vector<2x1x32xf32>
    %48 = vector.shape_cast %47 : vector<2x1x32xf32> to vector<2x32xf32>
    %49 = vector.extract_strided_slice %18 {offsets = [0, 7, 0], sizes = [2, 1, 32], strides = [1, 1, 1]} : vector<2x8x32xf32> to vector<2x1x32xf32>
    %50 = vector.shape_cast %49 : vector<2x1x32xf32> to vector<2x32xf32>
    %cst_16 = arith.constant 0.000000e+00 : f32
    %51 = vector.broadcast %cst_16 : f32 to vector<2x32xf32>
    %52 = vector.extract_strided_slice %16 {offsets = [0, 0], sizes = [2, 1], strides = [1, 1]} : vector<2x64xf32> to vector<2x1xf32>
    %53 = vector.broadcast %52 : vector<2x1xf32> to vector<2x32xf32>
    %54 = arith.mulf %53, %36 : vector<2x32xf32>
    %55 = vector.extract_strided_slice %16 {offsets = [0, 1], sizes = [2, 1], strides = [1, 1]} : vector<2x64xf32> to vector<2x1xf32>
    %56 = vector.broadcast %55 : vector<2x1xf32> to vector<2x32xf32>
    %57 = arith.mulf %56, %38 : vector<2x32xf32>
    %58 = arith.addf %54, %57 : vector<2x32xf32>
    %59 = vector.extract_strided_slice %16 {offsets = [0, 2], sizes = [2, 1], strides = [1, 1]} : vector<2x64xf32> to vector<2x1xf32>
    %60 = vector.broadcast %59 : vector<2x1xf32> to vector<2x32xf32>
    %61 = arith.mulf %60, %40 : vector<2x32xf32>
    %62 = arith.addf %58, %61 : vector<2x32xf32>
    %63 = vector.extract_strided_slice %16 {offsets = [0, 3], sizes = [2, 1], strides = [1, 1]} : vector<2x64xf32> to vector<2x1xf32>
    %64 = vector.broadcast %63 : vector<2x1xf32> to vector<2x32xf32>
    %65 = arith.mulf %64, %42 : vector<2x32xf32>
    %66 = arith.addf %62, %65 : vector<2x32xf32>
    %67 = vector.extract_strided_slice %16 {offsets = [0, 4], sizes = [2, 1], strides = [1, 1]} : vector<2x64xf32> to vector<2x1xf32>
    %68 = vector.broadcast %67 : vector<2x1xf32> to vector<2x32xf32>
    %69 = arith.mulf %68, %44 : vector<2x32xf32>
    %70 = arith.addf %66, %69 : vector<2x32xf32>
    %71 = vector.extract_strided_slice %16 {offsets = [0, 5], sizes = [2, 1], strides = [1, 1]} : vector<2x64xf32> to vector<2x1xf32>
    %72 = vector.broadcast %71 : vector<2x1xf32> to vector<2x32xf32>
    %73 = arith.mulf %72, %46 : vector<2x32xf32>
    %74 = arith.addf %70, %73 : vector<2x32xf32>
    %75 = vector.extract_strided_slice %16 {offsets = [0, 6], sizes = [2, 1], strides = [1, 1]} : vector<2x64xf32> to vector<2x1xf32>
    %76 = vector.broadcast %75 : vector<2x1xf32> to vector<2x32xf32>
    %77 = arith.mulf %76, %48 : vector<2x32xf32>
    %78 = arith.addf %74, %77 : vector<2x32xf32>
    %79 = vector.extract_strided_slice %16 {offsets = [0, 7], sizes = [2, 1], strides = [1, 1]} : vector<2x64xf32> to vector<2x1xf32>
    %80 = vector.broadcast %79 : vector<2x1xf32> to vector<2x32xf32>
    %81 = arith.mulf %80, %50 : vector<2x32xf32>
    %82 = arith.addf %78, %81 : vector<2x32xf32>
    %83 = arith.mulf %20, %82 : vector<2x32xf32>
    %84 = arith.addf %51, %83 : vector<2x32xf32>
    %85 = vector.extract_strided_slice %16 {offsets = [0, 8], sizes = [2, 1], strides = [1, 1]} : vector<2x64xf32> to vector<2x1xf32>
    %86 = vector.broadcast %85 : vector<2x1xf32> to vector<2x32xf32>
    %87 = arith.mulf %86, %36 : vector<2x32xf32>
    %88 = vector.extract_strided_slice %16 {offsets = [0, 9], sizes = [2, 1], strides = [1, 1]} : vector<2x64xf32> to vector<2x1xf32>
    %89 = vector.broadcast %88 : vector<2x1xf32> to vector<2x32xf32>
    %90 = arith.mulf %89, %38 : vector<2x32xf32>
    %91 = arith.addf %87, %90 : vector<2x32xf32>
    %92 = vector.extract_strided_slice %16 {offsets = [0, 10], sizes = [2, 1], strides = [1, 1]} : vector<2x64xf32> to vector<2x1xf32>
    %93 = vector.broadcast %92 : vector<2x1xf32> to vector<2x32xf32>
    %94 = arith.mulf %93, %40 : vector<2x32xf32>
    %95 = arith.addf %91, %94 : vector<2x32xf32>
    %96 = vector.extract_strided_slice %16 {offsets = [0, 11], sizes = [2, 1], strides = [1, 1]} : vector<2x64xf32> to vector<2x1xf32>
    %97 = vector.broadcast %96 : vector<2x1xf32> to vector<2x32xf32>
    %98 = arith.mulf %97, %42 : vector<2x32xf32>
    %99 = arith.addf %95, %98 : vector<2x32xf32>
    %100 = vector.extract_strided_slice %16 {offsets = [0, 12], sizes = [2, 1], strides = [1, 1]} : vector<2x64xf32> to vector<2x1xf32>
    %101 = vector.broadcast %100 : vector<2x1xf32> to vector<2x32xf32>
    %102 = arith.mulf %101, %44 : vector<2x32xf32>
    %103 = arith.addf %99, %102 : vector<2x32xf32>
    %104 = vector.extract_strided_slice %16 {offsets = [0, 13], sizes = [2, 1], strides = [1, 1]} : vector<2x64xf32> to vector<2x1xf32>
    %105 = vector.broadcast %104 : vector<2x1xf32> to vector<2x32xf32>
    %106 = arith.mulf %105, %46 : vector<2x32xf32>
    %107 = arith.addf %103, %106 : vector<2x32xf32>
    %108 = vector.extract_strided_slice %16 {offsets = [0, 14], sizes = [2, 1], strides = [1, 1]} : vector<2x64xf32> to vector<2x1xf32>
    %109 = vector.broadcast %108 : vector<2x1xf32> to vector<2x32xf32>
    %110 = arith.mulf %109, %48 : vector<2x32xf32>
    %111 = arith.addf %107, %110 : vector<2x32xf32>
    %112 = vector.extract_strided_slice %16 {offsets = [0, 15], sizes = [2, 1], strides = [1, 1]} : vector<2x64xf32> to vector<2x1xf32>
    %113 = vector.broadcast %112 : vector<2x1xf32> to vector<2x32xf32>
    %114 = arith.mulf %113, %50 : vector<2x32xf32>
    %115 = arith.addf %111, %114 : vector<2x32xf32>
    %116 = arith.mulf %22, %115 : vector<2x32xf32>
    %117 = arith.addf %84, %116 : vector<2x32xf32>
    %118 = vector.extract_strided_slice %16 {offsets = [0, 16], sizes = [2, 1], strides = [1, 1]} : vector<2x64xf32> to vector<2x1xf32>
    %119 = vector.broadcast %118 : vector<2x1xf32> to vector<2x32xf32>
    %120 = arith.mulf %119, %36 : vector<2x32xf32>
    %121 = vector.extract_strided_slice %16 {offsets = [0, 17], sizes = [2, 1], strides = [1, 1]} : vector<2x64xf32> to vector<2x1xf32>
    %122 = vector.broadcast %121 : vector<2x1xf32> to vector<2x32xf32>
    %123 = arith.mulf %122, %38 : vector<2x32xf32>
    %124 = arith.addf %120, %123 : vector<2x32xf32>
    %125 = vector.extract_strided_slice %16 {offsets = [0, 18], sizes = [2, 1], strides = [1, 1]} : vector<2x64xf32> to vector<2x1xf32>
    %126 = vector.broadcast %125 : vector<2x1xf32> to vector<2x32xf32>
    %127 = arith.mulf %126, %40 : vector<2x32xf32>
    %128 = arith.addf %124, %127 : vector<2x32xf32>
    %129 = vector.extract_strided_slice %16 {offsets = [0, 19], sizes = [2, 1], strides = [1, 1]} : vector<2x64xf32> to vector<2x1xf32>
    %130 = vector.broadcast %129 : vector<2x1xf32> to vector<2x32xf32>
    %131 = arith.mulf %130, %42 : vector<2x32xf32>
    %132 = arith.addf %128, %131 : vector<2x32xf32>
    %133 = vector.extract_strided_slice %16 {offsets = [0, 20], sizes = [2, 1], strides = [1, 1]} : vector<2x64xf32> to vector<2x1xf32>
    %134 = vector.broadcast %133 : vector<2x1xf32> to vector<2x32xf32>
    %135 = arith.mulf %134, %44 : vector<2x32xf32>
    %136 = arith.addf %132, %135 : vector<2x32xf32>
    %137 = vector.extract_strided_slice %16 {offsets = [0, 21], sizes = [2, 1], strides = [1, 1]} : vector<2x64xf32> to vector<2x1xf32>
    %138 = vector.broadcast %137 : vector<2x1xf32> to vector<2x32xf32>
    %139 = arith.mulf %138, %46 : vector<2x32xf32>
    %140 = arith.addf %136, %139 : vector<2x32xf32>
    %141 = vector.extract_strided_slice %16 {offsets = [0, 22], sizes = [2, 1], strides = [1, 1]} : vector<2x64xf32> to vector<2x1xf32>
    %142 = vector.broadcast %141 : vector<2x1xf32> to vector<2x32xf32>
    %143 = arith.mulf %142, %48 : vector<2x32xf32>
    %144 = arith.addf %140, %143 : vector<2x32xf32>
    %145 = vector.extract_strided_slice %16 {offsets = [0, 23], sizes = [2, 1], strides = [1, 1]} : vector<2x64xf32> to vector<2x1xf32>
    %146 = vector.broadcast %145 : vector<2x1xf32> to vector<2x32xf32>
    %147 = arith.mulf %146, %50 : vector<2x32xf32>
    %148 = arith.addf %144, %147 : vector<2x32xf32>
    %149 = arith.mulf %24, %148 : vector<2x32xf32>
    %150 = arith.addf %117, %149 : vector<2x32xf32>
    %151 = vector.extract_strided_slice %16 {offsets = [0, 24], sizes = [2, 1], strides = [1, 1]} : vector<2x64xf32> to vector<2x1xf32>
    %152 = vector.broadcast %151 : vector<2x1xf32> to vector<2x32xf32>
    %153 = arith.mulf %152, %36 : vector<2x32xf32>
    %154 = vector.extract_strided_slice %16 {offsets = [0, 25], sizes = [2, 1], strides = [1, 1]} : vector<2x64xf32> to vector<2x1xf32>
    %155 = vector.broadcast %154 : vector<2x1xf32> to vector<2x32xf32>
    %156 = arith.mulf %155, %38 : vector<2x32xf32>
    %157 = arith.addf %153, %156 : vector<2x32xf32>
    %158 = vector.extract_strided_slice %16 {offsets = [0, 26], sizes = [2, 1], strides = [1, 1]} : vector<2x64xf32> to vector<2x1xf32>
    %159 = vector.broadcast %158 : vector<2x1xf32> to vector<2x32xf32>
    %160 = arith.mulf %159, %40 : vector<2x32xf32>
    %161 = arith.addf %157, %160 : vector<2x32xf32>
    %162 = vector.extract_strided_slice %16 {offsets = [0, 27], sizes = [2, 1], strides = [1, 1]} : vector<2x64xf32> to vector<2x1xf32>
    %163 = vector.broadcast %162 : vector<2x1xf32> to vector<2x32xf32>
    %164 = arith.mulf %163, %42 : vector<2x32xf32>
    %165 = arith.addf %161, %164 : vector<2x32xf32>
    %166 = vector.extract_strided_slice %16 {offsets = [0, 28], sizes = [2, 1], strides = [1, 1]} : vector<2x64xf32> to vector<2x1xf32>
    %167 = vector.broadcast %166 : vector<2x1xf32> to vector<2x32xf32>
    %168 = arith.mulf %167, %44 : vector<2x32xf32>
    %169 = arith.addf %165, %168 : vector<2x32xf32>
    %170 = vector.extract_strided_slice %16 {offsets = [0, 29], sizes = [2, 1], strides = [1, 1]} : vector<2x64xf32> to vector<2x1xf32>
    %171 = vector.broadcast %170 : vector<2x1xf32> to vector<2x32xf32>
    %172 = arith.mulf %171, %46 : vector<2x32xf32>
    %173 = arith.addf %169, %172 : vector<2x32xf32>
    %174 = vector.extract_strided_slice %16 {offsets = [0, 30], sizes = [2, 1], strides = [1, 1]} : vector<2x64xf32> to vector<2x1xf32>
    %175 = vector.broadcast %174 : vector<2x1xf32> to vector<2x32xf32>
    %176 = arith.mulf %175, %48 : vector<2x32xf32>
    %177 = arith.addf %173, %176 : vector<2x32xf32>
    %178 = vector.extract_strided_slice %16 {offsets = [0, 31], sizes = [2, 1], strides = [1, 1]} : vector<2x64xf32> to vector<2x1xf32>
    %179 = vector.broadcast %178 : vector<2x1xf32> to vector<2x32xf32>
    %180 = arith.mulf %179, %50 : vector<2x32xf32>
    %181 = arith.addf %177, %180 : vector<2x32xf32>
    %182 = arith.mulf %26, %181 : vector<2x32xf32>
    %183 = arith.addf %150, %182 : vector<2x32xf32>
    %184 = vector.extract_strided_slice %16 {offsets = [0, 32], sizes = [2, 1], strides = [1, 1]} : vector<2x64xf32> to vector<2x1xf32>
    %185 = vector.broadcast %184 : vector<2x1xf32> to vector<2x32xf32>
    %186 = arith.mulf %185, %36 : vector<2x32xf32>
    %187 = vector.extract_strided_slice %16 {offsets = [0, 33], sizes = [2, 1], strides = [1, 1]} : vector<2x64xf32> to vector<2x1xf32>
    %188 = vector.broadcast %187 : vector<2x1xf32> to vector<2x32xf32>
    %189 = arith.mulf %188, %38 : vector<2x32xf32>
    %190 = arith.addf %186, %189 : vector<2x32xf32>
    %191 = vector.extract_strided_slice %16 {offsets = [0, 34], sizes = [2, 1], strides = [1, 1]} : vector<2x64xf32> to vector<2x1xf32>
    %192 = vector.broadcast %191 : vector<2x1xf32> to vector<2x32xf32>
    %193 = arith.mulf %192, %40 : vector<2x32xf32>
    %194 = arith.addf %190, %193 : vector<2x32xf32>
    %195 = vector.extract_strided_slice %16 {offsets = [0, 35], sizes = [2, 1], strides = [1, 1]} : vector<2x64xf32> to vector<2x1xf32>
    %196 = vector.broadcast %195 : vector<2x1xf32> to vector<2x32xf32>
    %197 = arith.mulf %196, %42 : vector<2x32xf32>
    %198 = arith.addf %194, %197 : vector<2x32xf32>
    %199 = vector.extract_strided_slice %16 {offsets = [0, 36], sizes = [2, 1], strides = [1, 1]} : vector<2x64xf32> to vector<2x1xf32>
    %200 = vector.broadcast %199 : vector<2x1xf32> to vector<2x32xf32>
    %201 = arith.mulf %200, %44 : vector<2x32xf32>
    %202 = arith.addf %198, %201 : vector<2x32xf32>
    %203 = vector.extract_strided_slice %16 {offsets = [0, 37], sizes = [2, 1], strides = [1, 1]} : vector<2x64xf32> to vector<2x1xf32>
    %204 = vector.broadcast %203 : vector<2x1xf32> to vector<2x32xf32>
    %205 = arith.mulf %204, %46 : vector<2x32xf32>
    %206 = arith.addf %202, %205 : vector<2x32xf32>
    %207 = vector.extract_strided_slice %16 {offsets = [0, 38], sizes = [2, 1], strides = [1, 1]} : vector<2x64xf32> to vector<2x1xf32>
    %208 = vector.broadcast %207 : vector<2x1xf32> to vector<2x32xf32>
    %209 = arith.mulf %208, %48 : vector<2x32xf32>
    %210 = arith.addf %206, %209 : vector<2x32xf32>
    %211 = vector.extract_strided_slice %16 {offsets = [0, 39], sizes = [2, 1], strides = [1, 1]} : vector<2x64xf32> to vector<2x1xf32>
    %212 = vector.broadcast %211 : vector<2x1xf32> to vector<2x32xf32>
    %213 = arith.mulf %212, %50 : vector<2x32xf32>
    %214 = arith.addf %210, %213 : vector<2x32xf32>
    %215 = arith.mulf %28, %214 : vector<2x32xf32>
    %216 = arith.addf %183, %215 : vector<2x32xf32>
    %217 = vector.extract_strided_slice %16 {offsets = [0, 40], sizes = [2, 1], strides = [1, 1]} : vector<2x64xf32> to vector<2x1xf32>
    %218 = vector.broadcast %217 : vector<2x1xf32> to vector<2x32xf32>
    %219 = arith.mulf %218, %36 : vector<2x32xf32>
    %220 = vector.extract_strided_slice %16 {offsets = [0, 41], sizes = [2, 1], strides = [1, 1]} : vector<2x64xf32> to vector<2x1xf32>
    %221 = vector.broadcast %220 : vector<2x1xf32> to vector<2x32xf32>
    %222 = arith.mulf %221, %38 : vector<2x32xf32>
    %223 = arith.addf %219, %222 : vector<2x32xf32>
    %224 = vector.extract_strided_slice %16 {offsets = [0, 42], sizes = [2, 1], strides = [1, 1]} : vector<2x64xf32> to vector<2x1xf32>
    %225 = vector.broadcast %224 : vector<2x1xf32> to vector<2x32xf32>
    %226 = arith.mulf %225, %40 : vector<2x32xf32>
    %227 = arith.addf %223, %226 : vector<2x32xf32>
    %228 = vector.extract_strided_slice %16 {offsets = [0, 43], sizes = [2, 1], strides = [1, 1]} : vector<2x64xf32> to vector<2x1xf32>
    %229 = vector.broadcast %228 : vector<2x1xf32> to vector<2x32xf32>
    %230 = arith.mulf %229, %42 : vector<2x32xf32>
    %231 = arith.addf %227, %230 : vector<2x32xf32>
    %232 = vector.extract_strided_slice %16 {offsets = [0, 44], sizes = [2, 1], strides = [1, 1]} : vector<2x64xf32> to vector<2x1xf32>
    %233 = vector.broadcast %232 : vector<2x1xf32> to vector<2x32xf32>
    %234 = arith.mulf %233, %44 : vector<2x32xf32>
    %235 = arith.addf %231, %234 : vector<2x32xf32>
    %236 = vector.extract_strided_slice %16 {offsets = [0, 45], sizes = [2, 1], strides = [1, 1]} : vector<2x64xf32> to vector<2x1xf32>
    %237 = vector.broadcast %236 : vector<2x1xf32> to vector<2x32xf32>
    %238 = arith.mulf %237, %46 : vector<2x32xf32>
    %239 = arith.addf %235, %238 : vector<2x32xf32>
    %240 = vector.extract_strided_slice %16 {offsets = [0, 46], sizes = [2, 1], strides = [1, 1]} : vector<2x64xf32> to vector<2x1xf32>
    %241 = vector.broadcast %240 : vector<2x1xf32> to vector<2x32xf32>
    %242 = arith.mulf %241, %48 : vector<2x32xf32>
    %243 = arith.addf %239, %242 : vector<2x32xf32>
    %244 = vector.extract_strided_slice %16 {offsets = [0, 47], sizes = [2, 1], strides = [1, 1]} : vector<2x64xf32> to vector<2x1xf32>
    %245 = vector.broadcast %244 : vector<2x1xf32> to vector<2x32xf32>
    %246 = arith.mulf %245, %50 : vector<2x32xf32>
    %247 = arith.addf %243, %246 : vector<2x32xf32>
    %248 = arith.mulf %30, %247 : vector<2x32xf32>
    %249 = arith.addf %216, %248 : vector<2x32xf32>
    %250 = vector.extract_strided_slice %16 {offsets = [0, 48], sizes = [2, 1], strides = [1, 1]} : vector<2x64xf32> to vector<2x1xf32>
    %251 = vector.broadcast %250 : vector<2x1xf32> to vector<2x32xf32>
    %252 = arith.mulf %251, %36 : vector<2x32xf32>
    %253 = vector.extract_strided_slice %16 {offsets = [0, 49], sizes = [2, 1], strides = [1, 1]} : vector<2x64xf32> to vector<2x1xf32>
    %254 = vector.broadcast %253 : vector<2x1xf32> to vector<2x32xf32>
    %255 = arith.mulf %254, %38 : vector<2x32xf32>
    %256 = arith.addf %252, %255 : vector<2x32xf32>
    %257 = vector.extract_strided_slice %16 {offsets = [0, 50], sizes = [2, 1], strides = [1, 1]} : vector<2x64xf32> to vector<2x1xf32>
    %258 = vector.broadcast %257 : vector<2x1xf32> to vector<2x32xf32>
    %259 = arith.mulf %258, %40 : vector<2x32xf32>
    %260 = arith.addf %256, %259 : vector<2x32xf32>
    %261 = vector.extract_strided_slice %16 {offsets = [0, 51], sizes = [2, 1], strides = [1, 1]} : vector<2x64xf32> to vector<2x1xf32>
    %262 = vector.broadcast %261 : vector<2x1xf32> to vector<2x32xf32>
    %263 = arith.mulf %262, %42 : vector<2x32xf32>
    %264 = arith.addf %260, %263 : vector<2x32xf32>
    %265 = vector.extract_strided_slice %16 {offsets = [0, 52], sizes = [2, 1], strides = [1, 1]} : vector<2x64xf32> to vector<2x1xf32>
    %266 = vector.broadcast %265 : vector<2x1xf32> to vector<2x32xf32>
    %267 = arith.mulf %266, %44 : vector<2x32xf32>
    %268 = arith.addf %264, %267 : vector<2x32xf32>
    %269 = vector.extract_strided_slice %16 {offsets = [0, 53], sizes = [2, 1], strides = [1, 1]} : vector<2x64xf32> to vector<2x1xf32>
    %270 = vector.broadcast %269 : vector<2x1xf32> to vector<2x32xf32>
    %271 = arith.mulf %270, %46 : vector<2x32xf32>
    %272 = arith.addf %268, %271 : vector<2x32xf32>
    %273 = vector.extract_strided_slice %16 {offsets = [0, 54], sizes = [2, 1], strides = [1, 1]} : vector<2x64xf32> to vector<2x1xf32>
    %274 = vector.broadcast %273 : vector<2x1xf32> to vector<2x32xf32>
    %275 = arith.mulf %274, %48 : vector<2x32xf32>
    %276 = arith.addf %272, %275 : vector<2x32xf32>
    %277 = vector.extract_strided_slice %16 {offsets = [0, 55], sizes = [2, 1], strides = [1, 1]} : vector<2x64xf32> to vector<2x1xf32>
    %278 = vector.broadcast %277 : vector<2x1xf32> to vector<2x32xf32>
    %279 = arith.mulf %278, %50 : vector<2x32xf32>
    %280 = arith.addf %276, %279 : vector<2x32xf32>
    %281 = arith.mulf %32, %280 : vector<2x32xf32>
    %282 = arith.addf %249, %281 : vector<2x32xf32>
    %283 = vector.extract_strided_slice %16 {offsets = [0, 56], sizes = [2, 1], strides = [1, 1]} : vector<2x64xf32> to vector<2x1xf32>
    %284 = vector.broadcast %283 : vector<2x1xf32> to vector<2x32xf32>
    %285 = arith.mulf %284, %36 : vector<2x32xf32>
    %286 = vector.extract_strided_slice %16 {offsets = [0, 57], sizes = [2, 1], strides = [1, 1]} : vector<2x64xf32> to vector<2x1xf32>
    %287 = vector.broadcast %286 : vector<2x1xf32> to vector<2x32xf32>
    %288 = arith.mulf %287, %38 : vector<2x32xf32>
    %289 = arith.addf %285, %288 : vector<2x32xf32>
    %290 = vector.extract_strided_slice %16 {offsets = [0, 58], sizes = [2, 1], strides = [1, 1]} : vector<2x64xf32> to vector<2x1xf32>
    %291 = vector.broadcast %290 : vector<2x1xf32> to vector<2x32xf32>
    %292 = arith.mulf %291, %40 : vector<2x32xf32>
    %293 = arith.addf %289, %292 : vector<2x32xf32>
    %294 = vector.extract_strided_slice %16 {offsets = [0, 59], sizes = [2, 1], strides = [1, 1]} : vector<2x64xf32> to vector<2x1xf32>
    %295 = vector.broadcast %294 : vector<2x1xf32> to vector<2x32xf32>
    %296 = arith.mulf %295, %42 : vector<2x32xf32>
    %297 = arith.addf %293, %296 : vector<2x32xf32>
    %298 = vector.extract_strided_slice %16 {offsets = [0, 60], sizes = [2, 1], strides = [1, 1]} : vector<2x64xf32> to vector<2x1xf32>
    %299 = vector.broadcast %298 : vector<2x1xf32> to vector<2x32xf32>
    %300 = arith.mulf %299, %44 : vector<2x32xf32>
    %301 = arith.addf %297, %300 : vector<2x32xf32>
    %302 = vector.extract_strided_slice %16 {offsets = [0, 61], sizes = [2, 1], strides = [1, 1]} : vector<2x64xf32> to vector<2x1xf32>
    %303 = vector.broadcast %302 : vector<2x1xf32> to vector<2x32xf32>
    %304 = arith.mulf %303, %46 : vector<2x32xf32>
    %305 = arith.addf %301, %304 : vector<2x32xf32>
    %306 = vector.extract_strided_slice %16 {offsets = [0, 62], sizes = [2, 1], strides = [1, 1]} : vector<2x64xf32> to vector<2x1xf32>
    %307 = vector.broadcast %306 : vector<2x1xf32> to vector<2x32xf32>
    %308 = arith.mulf %307, %48 : vector<2x32xf32>
    %309 = arith.addf %305, %308 : vector<2x32xf32>
    %310 = vector.extract_strided_slice %16 {offsets = [0, 63], sizes = [2, 1], strides = [1, 1]} : vector<2x64xf32> to vector<2x1xf32>
    %311 = vector.broadcast %310 : vector<2x1xf32> to vector<2x32xf32>
    %312 = arith.mulf %311, %50 : vector<2x32xf32>
    %313 = arith.addf %309, %312 : vector<2x32xf32>
    %314 = arith.mulf %34, %313 : vector<2x32xf32>
    %315 = arith.addf %282, %314 : vector<2x32xf32>
    %c0_17 = arith.constant 0 : index
    %c0_18 = arith.constant 0 : index
    %316 = vector.load %arg8[%c0_17, %c0_18] : memref<32x32xf32, #tpu.memory_space<vmem>>, vector<32x32xf32>
    %cst_19 = arith.constant dense<0.000000e+00> : vector<2x32xf32>
    %317 = tpu.matmul %315, %316, %cst_19 {dimension_numbers = #tpu.dot_dimension_numbers<[1], [0], [0], [1], [0, 0, 1, 1], [], []>} : vector<2x32xf32>, vector<32x32xf32>, vector<2x32xf32> -> vector<2x32xf32>
    %c0_20 = arith.constant 0 : index
    %c0_21 = arith.constant 0 : index
    %318 = vector.load %arg9[%c0_20, %c0_21] : memref<1x32xf32, #tpu.memory_space<vmem>>, vector<1x32xf32>
    %319 = vector.broadcast %318 : vector<1x32xf32> to vector<2x32xf32>
    %320 = arith.addf %317, %319 : vector<2x32xf32>
    %c0_22 = arith.constant 0 : index
    %c0_23 = arith.constant 0 : index
    %321 = vector.load %arg10[%c0_22, %c0_23] : memref<2x32xf32, #tpu.memory_space<vmem>>, vector<2x32xf32>
    tpu.vector_store %arg10[%c0_22, %c0_23], %320 {strides = array<i32>} : memref<2x32xf32, #tpu.memory_space<vmem>>, vector<2x32xf32>,
    return
  }
  func.func @transform_0(%arg0: i32) -> (i32, i32) {
    %c0_i32 = arith.constant 0 : i32
    %c0_i32_0 = arith.constant 0 : i32
    return %arg0, %c0_i32 : i32, i32
  }
  func.func @transform_1(%arg0: i32) -> (i32, i32) {
    %c0_i32 = arith.constant 0 : i32
    %c0_i32_0 = arith.constant 0 : i32
    return %arg0, %c0_i32 : i32, i32
  }
  func.func @transform_2(%arg0: i32) -> (i32, i32) {
    %c0_i32 = arith.constant 0 : i32
    %c0_i32_0 = arith.constant 0 : i32
    return %arg0, %c0_i32 : i32, i32
  }
  func.func @transform_3(%arg0: i32) -> (i32, i32) {
    %c0_i32 = arith.constant 0 : i32
    %c0_i32_0 = arith.constant 0 : i32
    %c0_i32_1 = arith.constant 0 : i32
    return %c0_i32, %c0_i32_0 : i32, i32
  }
  func.func @transform_4(%arg0: i32) -> (i32, i32) {
    %c0_i32 = arith.constant 0 : i32
    %c0_i32_0 = arith.constant 0 : i32
    %c0_i32_1 = arith.constant 0 : i32
    return %c0_i32, %c0_i32_0 : i32, i32
  }
  func.func @transform_5(%arg0: i32) -> (i32, i32) {
    %c0_i32 = arith.constant 0 : i32
    %c0_i32_0 = arith.constant 0 : i32
    %c0_i32_1 = arith.constant 0 : i32
    return %c0_i32, %c0_i32_0 : i32, i32
  }
  func.func @transform_6(%arg0: i32) -> (i32, i32) {
    %c0_i32 = arith.constant 0 : i32
    %c0_i32_0 = arith.constant 0 : i32
    %c0_i32_1 = arith.constant 0 : i32
    return %c0_i32, %c0_i32_0 : i32, i32
  }
  func.func @transform_7(%arg0: i32) -> (i32, i32) {
    %c0_i32 = arith.constant 0 : i32
    %c0_i32_0 = arith.constant 0 : i32
    %c0_i32_1 = arith.constant 0 : i32
    return %c0_i32, %c0_i32_0 : i32, i32
  }
  func.func @transform_8(%arg0: i32) -> (i32, i32) {
    %c0_i32 = arith.constant 0 : i32
    %c0_i32_0 = arith.constant 0 : i32
    %c0_i32_1 = arith.constant 0 : i32
    return %c0_i32, %c0_i32_0 : i32, i32
  }
  func.func @transform_9(%arg0: i32) -> (i32, i32) {
    %c0_i32 = arith.constant 0 : i32
    %c0_i32_0 = arith.constant 0 : i32
    return %arg0, %c0_i32 : i32, i32
  }
}

</mosaic_0001>

<llo_original>
// kernel: tpu_custom_call.1
$region0: #{tpu_custom_call.1}
  #allocation0 [shape = 'u32[]', space=smem, size = 0x4, offset = 0x4, fixed_abs, tag = 'smem constant byte address 0x4 - core index']
  #allocation1 [shape = 'u32[72,128]{1,0:T(1,128)}', space=vmem, size = 0x9000, scoped, tag = 'internal scratch']
  %s0 = inlined_call_operand.hbm [shape: f32[16,32], index: 0, kind: input, shape index: {}]
  %s1 = inlined_call_operand.hbm [shape: f32[16,32], index: 1, kind: input, shape index: {}]
  %s2 = inlined_call_operand.hbm [shape: f32[2,64], index: 2, kind: input, shape index: {}]
  %s3 = inlined_call_operand.hbm [shape: f32[32,32], index: 3, kind: input, shape index: {}]
  %s4 = inlined_call_operand.vmem [shape: f32[1,32], index: 4, kind: input, shape index: {}]
  %s5 = inlined_call_operand.hbm [shape: f32[32,32], index: 5, kind: input, shape index: {}]
  %s6 = inlined_call_operand.vmem [shape: f32[1,32], index: 6, kind: input, shape index: {}]
  %s7 = inlined_call_operand.hbm [shape: f32[32,32], index: 7, kind: input, shape index: {}]
  %s8 = inlined_call_operand.vmem [shape: f32[1,32], index: 8, kind: input, shape index: {}]
  %s9 = inlined_call_operand.hbm [shape: f32[2,32], index: 9, kind: output, shape index: {}]
  %s10 = sld [smem:[#allocation0]]
  $region70: #{tpu_custom_call.1} parent=0
    _
  %s12 = ssub.s32 1, %s10
  %s13 = scalar_select 0, %s12, %s10
  $region1: #{tpu_custom_call.1} parent=0
    #allocation2 [shape = 'u8[8192]{0}', space=vmem, size = 0x2000, scoped, tag = 'input window, operand 0, single buffered']
    #allocation3 [shape = 's32[1]{0}', space=sflag, size = 0x4, scoped, tag = 'scoped memory for tpu_custom_call.1']
    #allocation4 [shape = 's32[1]{0}', space=sflag, size = 0x4, scoped, tag = 'scoped memory for tpu_custom_call.1']
    #allocation5 [shape = 'u8[8192]{0}', space=vmem, size = 0x2000, scoped, tag = 'input window, operand 1, single buffered']
    #allocation6 [shape = 's32[1]{0}', space=sflag, size = 0x4, scoped, tag = 'scoped memory for tpu_custom_call.1']
    #allocation7 [shape = 'u8[1024]{0}', space=vmem, size = 0x400, scoped, tag = 'input window, operand 2, single buffered']
    #allocation8 [shape = 'u8[16384]{0}', space=vmem, size = 0x4000, scoped, tag = 'input window, operand 3, single buffered']
    #allocation9 [shape = 's32[1]{0}', space=sflag, size = 0x4, scoped, tag = 'scoped memory for tpu_custom_call.1']
    #allocation10 [shape = 'u8[16384]{0}', space=vmem, size = 0x4000, scoped, tag = 'input window, operand 5, single buffered']
    #allocation11 [shape = 'u8[16384]{0}', space=vmem, size = 0x4000, scoped, tag = 'input window, operand 7, single buffered']
    #allocation12 [shape = 's32[1]{0}', space=sflag, size = 0x4, scoped, tag = 'scoped memory for tpu_custom_call.1']
    #allocation13 [shape = 'u8[1024]{0}', space=vmem, size = 0x400, scoped, tag = 'output window, operand 0, single buffered']
    %14 = vsyncpa [#allocation3], 0
    %15 = vsyncpa [#allocation6], 0
    %16 = vsyncpa [#allocation9], 0
    %17 = vsyncpa [#allocation12], 0
    %18 = vsyncpa [#allocation4], 0
    // Predicated region
    $region2: #{tpu_custom_call.1} parent=1 // pred_check
      _
    $region3: #{tpu_custom_call.1} parent=1 // pred_check_branch
      %20 = sbr.rel (0) target = $region5
    $region4: #{tpu_custom_call.1} parent=1 // pred_region
      %22 = vsyncadd [#allocation3], 0
      %s23 = sshll.u32 %s0, 4
      %s24 = int_to_ptr.hbm [resolvable:$true] %s23
      %s25 = sshll.u32 [#allocation2], 4
      %s26 = int_to_ptr.vmem [resolvable:$true] %s25
      %31 = dma.hbm_to_vmem [thread:$0]  %s24, 256, %s26, [#allocation3], 128, 128, 8
    $region5: #{tpu_custom_call.1} parent=1 // pred_fallthru
      _
    // Predicated region
    $region6: #{tpu_custom_call.1} parent=1 // pred_check
      _
    $region7: #{tpu_custom_call.1} parent=1 // pred_check_branch
      %33 = sbr.rel (0) target = $region9
    $region8: #{tpu_custom_call.1} parent=1 // pred_region
      %35 = vsyncadd [#allocation6], 0
      %s36 = sshll.u32 %s1, 4
      %s37 = int_to_ptr.hbm [resolvable:$true] %s36
      %s38 = sshll.u32 [#allocation5], 4
      %s39 = int_to_ptr.vmem [resolvable:$true] %s38
      %44 = dma.hbm_to_vmem [thread:$0]  %s37, 256, %s39, [#allocation6], 128, 128, 8
    $region9: #{tpu_custom_call.1} parent=1 // pred_fallthru
      _
    // Predicated region
    $region10: #{tpu_custom_call.1} parent=1 // pred_check
      _
    $region11: #{tpu_custom_call.1} parent=1 // pred_check_branch
      %46 = sbr.rel (0) target = $region13
    $region12: #{tpu_custom_call.1} parent=1 // pred_region
      %48 = vsyncadd [#allocation6], 0
      %s50 = sshll.u32 %s2, 4
      %s51 = int_to_ptr.hbm [resolvable:$true] %s50
      %s52 = sshll.u32 [#allocation7], 4
      %s53 = int_to_ptr.vmem [resolvable:$true] %s52
      %55 = dma.hbm_to_vmem [thread:$0]  %s51, 32, %s53, [#allocation6]
    $region13: #{tpu_custom_call.1} parent=1 // pred_fallthru
      _
    // Predicated region
    $region14: #{tpu_custom_call.1} parent=1 // pred_check
      _
    $region15: #{tpu_custom_call.1} parent=1 // pred_check_branch
      %57 = sbr.rel (0) target = $region17
    $region16: #{tpu_custom_call.1} parent=1 // pred_region
      %59 = vsyncadd [#allocation9], 0
      %s60 = sshll.u32 %s3, 4
      %s61 = int_to_ptr.hbm [resolvable:$true] %s60
      %s62 = sshll.u32 [#allocation8], 4
      %s63 = int_to_ptr.vmem [resolvable:$true] %s62
      %68 = dma.hbm_to_vmem [thread:$0]  %s61, 512, %s63, [#allocation9], 128, 128, 8
    $region17: #{tpu_custom_call.1} parent=1 // pred_fallthru
      _
    // Predicated region
    $region18: #{tpu_custom_call.1} parent=1 // pred_check
      _
    $region19: #{tpu_custom_call.1} parent=1 // pred_check_branch
      %70 = sbr.rel (0) target = $region21
    $region20: #{tpu_custom_call.1} parent=1 // pred_region
      _
    $region21: #{tpu_custom_call.1} parent=1 // pred_fallthru
      _
    // Predicated region
    $region22: #{tpu_custom_call.1} parent=1 // pred_check
      _
    $region23: #{tpu_custom_call.1} parent=1 // pred_check_branch
      %72 = sbr.rel (0) target = $region25
    $region24: #{tpu_custom_call.1} parent=1 // pred_region
      %74 = vsyncadd [#allocation9], 0
      %s75 = sshll.u32 %s5, 4
      %s76 = int_to_ptr.hbm [resolvable:$true] %s75
      %s77 = sshll.u32 [#allocation10], 4
      %s78 = int_to_ptr.vmem [resolvable:$true] %s77
      %83 = dma.hbm_to_vmem [thread:$0]  %s76, 512, %s78, [#allocation9], 128, 128, 8
    $region25: #{tpu_custom_call.1} parent=1 // pred_fallthru
      _
    // Predicated region
    $region26: #{tpu_custom_call.1} parent=1 // pred_check
      _
    $region27: #{tpu_custom_call.1} parent=1 // pred_check_branch
      %85 = sbr.rel (0) target = $region29
    $region28: #{tpu_custom_call.1} parent=1 // pred_region
      _
    $region29: #{tpu_custom_call.1} parent=1 // pred_fallthru
      _
    // Predicated region
    $region30: #{tpu_custom_call.1} parent=1 // pred_check
      _
    $region31: #{tpu_custom_call.1} parent=1 // pred_check_branch
      %87 = sbr.rel (0) target = $region33
    $region32: #{tpu_custom_call.1} parent=1 // pred_region
      %89 = vsyncadd [#allocation12], 0
      %s90 = sshll.u32 %s7, 4
      %s91 = int_to_ptr.hbm [resolvable:$true] %s90
      %s92 = sshll.u32 [#allocation11], 4
      %s93 = int_to_ptr.vmem [resolvable:$true] %s92
      %98 = dma.hbm_to_vmem [thread:$0]  %s91, 512, %s93, [#allocation12], 128, 128, 8
    $region33: #{tpu_custom_call.1} parent=1 // pred_fallthru
      _
    // Predicated region
    $region34: #{tpu_custom_call.1} parent=1 // pred_check
      _
    $region35: #{tpu_custom_call.1} parent=1 // pred_check_branch
      %100 = sbr.rel (0) target = $region37
    $region36: #{tpu_custom_call.1} parent=1 // pred_region
      _
    $region37: #{tpu_custom_call.1} parent=1 // pred_fallthru
      _
    // Predicated region
    $region38: #{tpu_custom_call.1} parent=1 // pred_check
      _
    $region39: #{tpu_custom_call.1} parent=1 // pred_check_branch
      %102 = sbr.rel (0) target = $region41
    $region40: #{tpu_custom_call.1} parent=1 // pred_region
      %104 = dma.done [#allocation3], 256
    $region41: #{tpu_custom_call.1} parent=1 // pred_fallthru
      _
    // Predicated region
    $region42: #{tpu_custom_call.1} parent=1 // pred_check
      _
    $region43: #{tpu_custom_call.1} parent=1 // pred_check_branch
      %106 = sbr.rel (0) target = $region45
    $region44: #{tpu_custom_call.1} parent=1 // pred_region
      %108 = dma.done [#allocation6], 256
    $region45: #{tpu_custom_call.1} parent=1 // pred_fallthru
      _
    // Predicated region
    $region46: #{tpu_custom_call.1} parent=1 // pred_check
      _
    $region47: #{tpu_custom_call.1} parent=1 // pred_check_branch
      %110 = sbr.rel (0) target = $region49
    $region48: #{tpu_custom_call.1} parent=1 // pred_region
      %112 = dma.done [#allocation6], 32
    $region49: #{tpu_custom_call.1} parent=1 // pred_fallthru
      _
    // Predicated region
    $region50: #{tpu_custom_call.1} parent=1 // pred_check
      _
    $region51: #{tpu_custom_call.1} parent=1 // pred_check_branch
      %114 = sbr.rel (0) target = $region53
    $region52: #{tpu_custom_call.1} parent=1 // pred_region
      %116 = dma.done [#allocation9], 512
    $region53: #{tpu_custom_call.1} parent=1 // pred_fallthru
      _
    // Predicated region
    $region54: #{tpu_custom_call.1} parent=1 // pred_check
      _
    $region55: #{tpu_custom_call.1} parent=1 // pred_check_branch
      %118 = sbr.rel (0) target = $region57
    $region56: #{tpu_custom_call.1} parent=1 // pred_region
      %120 = dma.done [#allocation9], 512
    $region57: #{tpu_custom_call.1} parent=1 // pred_fallthru
      _
    // Predicated region
    $region58: #{tpu_custom_call.1} parent=1 // pred_check
      _
    $region59: #{tpu_custom_call.1} parent=1 // pred_check_branch
      %122 = sbr.rel (0) target = $region61
    $region60: #{tpu_custom_call.1} parent=1 // pred_region
      %124 = dma.done [#allocation12], 512
    $region61: #{tpu_custom_call.1} parent=1 // pred_fallthru
      _
    %v125 = vld [vmem:[#allocation2] sm:$0xff]
    %v126 = vld [vmem:[#allocation2 + $0x8] sm:$0xff]
    %v127 = vld [vmem:[#allocation8] sm:$0xff]
    %v128 = vld [vmem:[#allocation8 + $0x8] sm:$0xff]
    %v129 = vld [vmem:[#allocation8 + $0x10] sm:$0xff]
    %v130 = vld [vmem:[#allocation8 + $0x18] sm:$0xff]
    %v131 = vld [vmem:[%s4] sm:$0x1]
    %v133 = vperm.slane %v131, 0
    %vm135 = vcmask 261120
    %v137 = vsel %vm135, %v125, 0
    %v140 = vsel %vm135, %v126, 0
    %142 = vmatpush.msra.mxu0 0.0
    %143 = vmatpush.msra.mxu0 0.0
    %144 = vmatpush.msra.mxu0 0.0
    %145 = vmatpush.msra.mxu0 0.0
    %146 = vmatpush.msra.mxu0 0.0
    %147 = vmatpush.msra.mxu0 0.0
    %148 = vmatpush.msra.mxu0 0.0
    %149 = vmatpush.msra.mxu0 0.0
    %150 = vmatpush.msra.mxu0 0.0
    %151 = vmatpush.msra.mxu0 0.0
    %152 = vmatpush.msra.mxu0 0.0
    %153 = vmatpush.msra.mxu0 0.0
    %154 = vmatpush.msra.mxu0 %v130
    %155 = vmatpush.msra.mxu0 %v129
    %156 = vmatpush.msra.mxu0 %v128
    %157 = vmatpush.msra.mxu0 %v127
    %158 = vmatmul.f32.gmra.mxu0 %v137
    %v159 = vpop.f32.mrf.mxu0
    %v160 = vadd.f32 %v133, %v159
    %161 = vmatmul.f32.gmra.mxu0 %v140
    %v162 = vpop.f32.mrf.mxu0
    %v163 = vadd.f32 %v133, %v162
    %164 = vdwg.mxu0
    %v165 = vmax.f32 %v160, 0.0
    %v166 = vmax.f32 %v163, 0.0
    %v167 = vld [vmem:[#allocation5] sm:$0xff]
    %v168 = vld [vmem:[#allocation5 + $0x8] sm:$0xff]
    %v169 = vld [vmem:[#allocation10] sm:$0xff]
    %v170 = vld [vmem:[#allocation10 + $0x8] sm:$0xff]
    %v171 = vld [vmem:[#allocation10 + $0x10] sm:$0xff]
    %v172 = vld [vmem:[#allocation10 + $0x18] sm:$0xff]
    %v173 = vld [vmem:[%s6] sm:$0x1]
    %v175 = vperm.slane %v173, 0
    %v178 = vsel %vm135, %v167, 0
    %v181 = vsel %vm135, %v168, 0
    %183 = vmatpush.msra.mxu0 0.0
    %184 = vmatpush.msra.mxu0 0.0
    %185 = vmatpush.msra.mxu0 0.0
    %186 = vmatpush.msra.mxu0 0.0
    %187 = vmatpush.msra.mxu0 0.0
    %188 = vmatpush.msra.mxu0 0.0
    %189 = vmatpush.msra.mxu0 0.0
    %190 = vmatpush.msra.mxu0 0.0
    %191 = vmatpush.msra.mxu0 0.0
    %192 = vmatpush.msra.mxu0 0.0
    %193 = vmatpush.msra.mxu0 0.0
    %194 = vmatpush.msra.mxu0 0.0
    %195 = vmatpush.msra.mxu0 %v172
    %196 = vmatpush.msra.mxu0 %v171
    %197 = vmatpush.msra.mxu0 %v170
    %198 = vmatpush.msra.mxu0 %v169
    %199 = vmatmul.f32.gmra.mxu0 %v178
    %v200 = vpop.f32.mrf.mxu0
    %v201 = vadd.f32 %v175, %v200
    %202 = vmatmul.f32.gmra.mxu0 %v181
    %v203 = vpop.f32.mrf.mxu0
    %v204 = vadd.f32 %v175, %v203
    %205 = vdwg.mxu0
    %v206 = vmax.f32 %v201, 0.0
    %v207 = vmax.f32 %v204, 0.0
    %v208 = vld [vmem:[#allocation7] sm:$0x3]
    %210 = vset.pattern.permute.xlu0 0
    %211 = vperm.xlu0 %210, %v208
    %v212 = vpop.permute.xlu0 %211
    %v216 = vrot.slane %v207, 7
    %vm217 = vcmask 1041409
    %v218 = vsel %vm217, %v216, %v206
    %v220 = vmul.f32 %v212, %v218
    %221 = vset.pattern.permute.xlu0 1
    %222 = vperm.xlu0 %221, %v208
    %v223 = vpop.permute.xlu0 %222
    %v225 = vrot.slane %v206, 1
    %v226 = vsel %vm217, %v207, %v225
    %v228 = vmul.f32 %v223, %v226
    %v229 = vadd.f32 %v220, %v228
    %230 = vset.pattern.permute.xlu0 2
    %231 = vperm.xlu0 %230, %v208
    %v232 = vpop.permute.xlu0 %231
    %v234 = vrot.slane %v206, 2
    %v235 = vrot.slane %v207, 1
    %v236 = vsel %vm217, %v235, %v234
    %v238 = vmul.f32 %v232, %v236
    %v239 = vadd.f32 %v229, %v238
    %240 = vset.pattern.permute.xlu0 3
    %241 = vperm.xlu0 %240, %v208
    %v242 = vpop.permute.xlu0 %241
    %v244 = vrot.slane %v206, 3
    %v245 = vrot.slane %v207, 2
    %v246 = vsel %vm217, %v245, %v244
    %v248 = vmul.f32 %v242, %v246
    %v249 = vadd.f32 %v239, %v248
    %250 = vset.pattern.permute.xlu0 4
    %251 = vperm.xlu0 %250, %v208
    %v252 = vpop.permute.xlu0 %251
    %v254 = vrot.slane %v206, 4
    %v255 = vrot.slane %v207, 3
    %v256 = vsel %vm217, %v255, %v254
    %v258 = vmul.f32 %v252, %v256
    %v259 = vadd.f32 %v249, %v258
    %260 = vset.pattern.permute.xlu0 5
    %261 = vperm.xlu0 %260, %v208
    %v262 = vpop.permute.xlu0 %261
    %v264 = vrot.slane %v206, 5
    %v265 = vrot.slane %v207, 4
    %v266 = vsel %vm217, %v265, %v264
    %v268 = vmul.f32 %v262, %v266
    %v269 = vadd.f32 %v259, %v268
    %270 = vset.pattern.permute.xlu0 6
    %271 = vperm.xlu0 %270, %v208
    %v272 = vpop.permute.xlu0 %271
    %v274 = vrot.slane %v206, 6
    %v275 = vrot.slane %v207, 5
    %v276 = vsel %vm217, %v275, %v274
    %v278 = vmul.f32 %v272, %v276
    %v279 = vadd.f32 %v269, %v278
    %280 = vset.pattern.permute.xlu0 7
    %281 = vperm.xlu0 %280, %v208
    %v282 = vpop.permute.xlu0 %281
    %v284 = vrot.slane %v206, 7
    %v285 = vrot.slane %v207, 6
    %v286 = vsel %vm217, %v285, %v284
    %v288 = vmul.f32 %v282, %v286
    %v289 = vadd.f32 %v279, %v288
    %v291 = vrot.slane %v289, 1
    %v294 = vmul.f32 %v165, %v289
    %v295 = vmul.f32 %v166, %v291
    %v296 = vadd.f32 %v294, 0.0
    %v297 = vadd.f32 %v295, 0.0
    %298 = vset.pattern.permute.xlu0 8
    %299 = vperm.xlu0 %298, %v208
    %v300 = vpop.permute.xlu0 %299
    %v302 = vmul.f32 %v300, %v218
    %303 = vset.pattern.permute.xlu0 9
    %304 = vperm.xlu0 %303, %v208
    %v305 = vpop.permute.xlu0 %304
    %v307 = vmul.f32 %v305, %v226
    %v308 = vadd.f32 %v302, %v307
    %309 = vset.pattern.permute.xlu0 10
    %310 = vperm.xlu0 %309, %v208
    %v311 = vpop.permute.xlu0 %310
    %v313 = vmul.f32 %v311, %v236
    %v314 = vadd.f32 %v308, %v313
    %315 = vset.pattern.permute.xlu0 11
    %316 = vperm.xlu0 %315, %v208
    %v317 = vpop.permute.xlu0 %316
    %v319 = vmul.f32 %v317, %v246
    %v320 = vadd.f32 %v314, %v319
    %321 = vset.pattern.permute.xlu0 12
    %322 = vperm.xlu0 %321, %v208
    %v323 = vpop.permute.xlu0 %322
    %v325 = vmul.f32 %v323, %v256
    %v326 = vadd.f32 %v320, %v325
    %327 = vset.pattern.permute.xlu0 13
    %328 = vperm.xlu0 %327, %v208
    %v329 = vpop.permute.xlu0 %328
    %v331 = vmul.f32 %v329, %v266
    %v332 = vadd.f32 %v326, %v331
    %333 = vset.pattern.permute.xlu0 14
    %334 = vperm.xlu0 %333, %v208
    %v335 = vpop.permute.xlu0 %334
    %v337 = vmul.f32 %v335, %v276
    %v338 = vadd.f32 %v332, %v337
    %339 = vset.pattern.permute.xlu0 15
    %340 = vperm.xlu0 %339, %v208
    %v341 = vpop.permute.xlu0 %340
    %v343 = vmul.f32 %v341, %v286
    %v344 = vadd.f32 %v338, %v343
    %v346 = vrot.slane %v344, 7
    %v349 = vmul.f32 %v165, %v346
    %v350 = vmul.f32 %v166, %v344
    %v353 = vrot.slane %v349, 1
    %v354 = vrot.slane %v350, 1
    %v357 = vadd.f32 %v296, %v353
    %v358 = vadd.f32 %v297, %v354
    %359 = vset.pattern.permute.xlu0 16
    %360 = vperm.xlu0 %359, %v208
    %v361 = vpop.permute.xlu0 %360
    %v363 = vmul.f32 %v361, %v218
    %364 = vset.pattern.permute.xlu0 17
    %365 = vperm.xlu0 %364, %v208
    %v366 = vpop.permute.xlu0 %365
    %v368 = vmul.f32 %v366, %v226
    %v369 = vadd.f32 %v363, %v368
    %370 = vset.pattern.permute.xlu0 18
    %371 = vperm.xlu0 %370, %v208
    %v372 = vpop.permute.xlu0 %371
    %v374 = vmul.f32 %v372, %v236
    %v375 = vadd.f32 %v369, %v374
    %376 = vset.pattern.permute.xlu0 19
    %377 = vperm.xlu0 %376, %v208
    %v378 = vpop.permute.xlu0 %377
    %v380 = vmul.f32 %v378, %v246
    %v381 = vadd.f32 %v375, %v380
    %382 = vset.pattern.permute.xlu0 20
    %383 = vperm.xlu0 %382, %v208
    %v384 = vpop.permute.xlu0 %383
    %v386 = vmul.f32 %v384, %v256
    %v387 = vadd.f32 %v381, %v386
    %388 = vset.pattern.permute.xlu0 21
    %389 = vperm.xlu0 %388, %v208
    %v390 = vpop.permute.xlu0 %389
    %v392 = vmul.f32 %v390, %v266
    %v393 = vadd.f32 %v387, %v392
    %394 = vset.pattern.permute.xlu0 22
    %395 = vperm.xlu0 %394, %v208
    %v396 = vpop.permute.xlu0 %395
    %v398 = vmul.f32 %v396, %v276
    %v399 = vadd.f32 %v393, %v398
    %400 = vset.pattern.permute.xlu0 23
    %401 = vperm.xlu0 %400, %v208
    %v402 = vpop.permute.xlu0 %401
    %v404 = vmul.f32 %v402, %v286
    %v405 = vadd.f32 %v399, %v404
    %v407 = vrot.slane %v405, 6
    %v408 = vrot.slane %v405, 7
    %v411 = vmul.f32 %v165, %v407
    %v412 = vmul.f32 %v166, %v408
    %v415 = vrot.slane %v411, 2
    %v416 = vrot.slane %v412, 2
    %v419 = vadd.f32 %v357, %v415
    %v420 = vadd.f32 %v358, %v416
    %421 = vset.pattern.permute.xlu0 24
    %422 = vperm.xlu0 %421, %v208
    %v423 = vpop.permute.xlu0 %422
    %v425 = vmul.f32 %v423, %v218
    %426 = vset.pattern.permute.xlu0 25
    %427 = vperm.xlu0 %426, %v208
    %v428 = vpop.permute.xlu0 %427
    %v430 = vmul.f32 %v428, %v226
    %v431 = vadd.f32 %v425, %v430
    %432 = vset.pattern.permute.xlu0 26
    %433 = vperm.xlu0 %432, %v208
    %v434 = vpop.permute.xlu0 %433
    %v436 = vmul.f32 %v434, %v236
    %v437 = vadd.f32 %v431, %v436
    %438 = vset.pattern.permute.xlu0 27
    %439 = vperm.xlu0 %438, %v208
    %v440 = vpop.permute.xlu0 %439
    %v442 = vmul.f32 %v440, %v246
    %v443 = vadd.f32 %v437, %v442
    %444 = vset.pattern.permute.xlu0 28
    %445 = vperm.xlu0 %444, %v208
    %v446 = vpop.permute.xlu0 %445
    %v448 = vmul.f32 %v446, %v256
    %v449 = vadd.f32 %v443, %v448
    %450 = vset.pattern.permute.xlu0 29
    %451 = vperm.xlu0 %450, %v208
    %v452 = vpop.permute.xlu0 %451
    %v454 = vmul.f32 %v452, %v266
    %v455 = vadd.f32 %v449, %v454
    %456 = vset.pattern.permute.xlu0 30
    %457 = vperm.xlu0 %456, %v208
    %v458 = vpop.permute.xlu0 %457
    %v460 = vmul.f32 %v458, %v276
    %v461 = vadd.f32 %v455, %v460
    %462 = vset.pattern.permute.xlu0 31
    %463 = vperm.xlu0 %462, %v208
    %v464 = vpop.permute.xlu0 %463
    %v466 = vmul.f32 %v464, %v286
    %v467 = vadd.f32 %v461, %v466
    %v469 = vrot.slane %v467, 5
    %v470 = vrot.slane %v467, 6
    %v473 = vmul.f32 %v165, %v469
    %v474 = vmul.f32 %v166, %v470
    %v477 = vrot.slane %v473, 3
    %v478 = vrot.slane %v474, 3
    %v481 = vadd.f32 %v419, %v477
    %v482 = vadd.f32 %v420, %v478
    %483 = vset.pattern.permute.xlu0 32
    %484 = vperm.xlu0 %483, %v208
    %v485 = vpop.permute.xlu0 %484
    %v487 = vmul.f32 %v485, %v218
    %488 = vset.pattern.permute.xlu0 33
    %489 = vperm.xlu0 %488, %v208
    %v490 = vpop.permute.xlu0 %489
    %v492 = vmul.f32 %v490, %v226
    %v493 = vadd.f32 %v487, %v492
    %494 = vset.pattern.permute.xlu0 34
    %495 = vperm.xlu0 %494, %v208
    %v496 = vpop.permute.xlu0 %495
    %v498 = vmul.f32 %v496, %v236
    %v499 = vadd.f32 %v493, %v498
    %500 = vset.pattern.permute.xlu0 35
    %501 = vperm.xlu0 %500, %v208
    %v502 = vpop.permute.xlu0 %501
    %v504 = vmul.f32 %v502, %v246
    %v505 = vadd.f32 %v499, %v504
    %506 = vset.pattern.permute.xlu0 36
    %507 = vperm.xlu0 %506, %v208
    %v508 = vpop.permute.xlu0 %507
    %v510 = vmul.f32 %v508, %v256
    %v511 = vadd.f32 %v505, %v510
    %512 = vset.pattern.permute.xlu0 37
    %513 = vperm.xlu0 %512, %v208
    %v514 = vpop.permute.xlu0 %513
    %v516 = vmul.f32 %v514, %v266
    %v517 = vadd.f32 %v511, %v516
    %518 = vset.pattern.permute.xlu0 38
    %519 = vperm.xlu0 %518, %v208
    %v520 = vpop.permute.xlu0 %519
    %v522 = vmul.f32 %v520, %v276
    %v523 = vadd.f32 %v517, %v522
    %524 = vset.pattern.permute.xlu0 39
    %525 = vperm.xlu0 %524, %v208
    %v526 = vpop.permute.xlu0 %525
    %v528 = vmul.f32 %v526, %v286
    %v529 = vadd.f32 %v523, %v528
    %v531 = vrot.slane %v529, 4
    %v532 = vrot.slane %v529, 5
    %v535 = vmul.f32 %v165, %v531
    %v536 = vmul.f32 %v166, %v532
    %v539 = vrot.slane %v535, 4
    %v540 = vrot.slane %v536, 4
    %v543 = vadd.f32 %v481, %v539
    %v544 = vadd.f32 %v482, %v540
    %545 = vset.pattern.permute.xlu0 40
    %546 = vperm.xlu0 %545, %v208
    %v547 = vpop.permute.xlu0 %546
    %v549 = vmul.f32 %v547, %v218
    %550 = vset.pattern.permute.xlu0 41
    %551 = vperm.xlu0 %550, %v208
    %v552 = vpop.permute.xlu0 %551
    %v554 = vmul.f32 %v552, %v226
    %v555 = vadd.f32 %v549, %v554
    %556 = vset.pattern.permute.xlu0 42
    %557 = vperm.xlu0 %556, %v208
    %v558 = vpop.permute.xlu0 %557
    %v560 = vmul.f32 %v558, %v236
    %v561 = vadd.f32 %v555, %v560
    %562 = vset.pattern.permute.xlu0 43
    %563 = vperm.xlu0 %562, %v208
    %v564 = vpop.permute.xlu0 %563
    %v566 = vmul.f32 %v564, %v246
    %v567 = vadd.f32 %v561, %v566
    %568 = vset.pattern.permute.xlu0 44
    %569 = vperm.xlu0 %568, %v208
    %v570 = vpop.permute.xlu0 %569
    %v572 = vmul.f32 %v570, %v256
    %v573 = vadd.f32 %v567, %v572
    %574 = vset.pattern.permute.xlu0 45
    %575 = vperm.xlu0 %574, %v208
    %v576 = vpop.permute.xlu0 %575
    %v578 = vmul.f32 %v576, %v266
    %v579 = vadd.f32 %v573, %v578
    %580 = vset.pattern.permute.xlu0 46
    %581 = vperm.xlu0 %580, %v208
    %v582 = vpop.permute.xlu0 %581
    %v584 = vmul.f32 %v582, %v276
    %v585 = vadd.f32 %v579, %v584
    %586 = vset.pattern.permute.xlu0 47
    %587 = vperm.xlu0 %586, %v208
    %v588 = vpop.permute.xlu0 %587
    %v590 = vmul.f32 %v588, %v286
    %v591 = vadd.f32 %v585, %v590
    %v593 = vrot.slane %v591, 3
    %v594 = vrot.slane %v591, 4
    %v597 = vmul.f32 %v165, %v593
    %v598 = vmul.f32 %v166, %v594
    %v601 = vrot.slane %v597, 5
    %v602 = vrot.slane %v598, 5
    %v605 = vadd.f32 %v543, %v601
    %v606 = vadd.f32 %v544, %v602
    %607 = vset.pattern.permute.xlu0 48
    %608 = vperm.xlu0 %607, %v208
    %v609 = vpop.permute.xlu0 %608
    %v611 = vmul.f32 %v609, %v218
    %612 = vset.pattern.permute.xlu0 49
    %613 = vperm.xlu0 %612, %v208
    %v614 = vpop.permute.xlu0 %613
    %v616 = vmul.f32 %v614, %v226
    %v617 = vadd.f32 %v611, %v616
    %618 = vset.pattern.permute.xlu0 50
    %619 = vperm.xlu0 %618, %v208
    %v620 = vpop.permute.xlu0 %619
    %v622 = vmul.f32 %v620, %v236
    %v623 = vadd.f32 %v617, %v622
    %624 = vset.pattern.permute.xlu0 51
    %625 = vperm.xlu0 %624, %v208
    %v626 = vpop.permute.xlu0 %625
    %v628 = vmul.f32 %v626, %v246
    %v629 = vadd.f32 %v623, %v628
    %630 = vset.pattern.permute.xlu0 52
    %631 = vperm.xlu0 %630, %v208
    %v632 = vpop.permute.xlu0 %631
    %v634 = vmul.f32 %v632, %v256
    %v635 = vadd.f32 %v629, %v634
    %636 = vset.pattern.permute.xlu0 53
    %637 = vperm.xlu0 %636, %v208
    %v638 = vpop.permute.xlu0 %637
    %v640 = vmul.f32 %v638, %v266
    %v641 = vadd.f32 %v635, %v640
    %642 = vset.pattern.permute.xlu0 54
    %643 = vperm.xlu0 %642, %v208
    %v644 = vpop.permute.xlu0 %643
    %v646 = vmul.f32 %v644, %v276
    %v647 = vadd.f32 %v641, %v646
    %648 = vset.pattern.permute.xlu0 55
    %649 = vperm.xlu0 %648, %v208
    %v650 = vpop.permute.xlu0 %649
    %v652 = vmul.f32 %v650, %v286
    %v653 = vadd.f32 %v647, %v652
    %v655 = vrot.slane %v653, 2
    %v656 = vrot.slane %v653, 3
    %v659 = vmul.f32 %v165, %v655
    %v660 = vmul.f32 %v166, %v656
    %v663 = vrot.slane %v659, 6
    %v664 = vrot.slane %v660, 6
    %v667 = vadd.f32 %v605, %v663
    %v668 = vadd.f32 %v606, %v664
    %669 = vset.pattern.permute.xlu0 56
    %670 = vperm.xlu0 %669, %v208
    %v671 = vpop.permute.xlu0 %670
    %v673 = vmul.f32 %v671, %v218
    %674 = vset.pattern.permute.xlu0 57
    %675 = vperm.xlu0 %674, %v208
    %v676 = vpop.permute.xlu0 %675
    %v678 = vmul.f32 %v676, %v226
    %v679 = vadd.f32 %v673, %v678
    %680 = vset.pattern.permute.xlu0 58
    %681 = vperm.xlu0 %680, %v208
    %v682 = vpop.permute.xlu0 %681
    %v684 = vmul.f32 %v682, %v236
    %v685 = vadd.f32 %v679, %v684
    %686 = vset.pattern.permute.xlu0 59
    %687 = vperm.xlu0 %686, %v208
    %v688 = vpop.permute.xlu0 %687
    %v690 = vmul.f32 %v688, %v246
    %v691 = vadd.f32 %v685, %v690
    %692 = vset.pattern.permute.xlu0 60
    %693 = vperm.xlu0 %692, %v208
    %v694 = vpop.permute.xlu0 %693
    %v696 = vmul.f32 %v694, %v256
    %v697 = vadd.f32 %v691, %v696
    %698 = vset.pattern.permute.xlu0 61
    %699 = vperm.xlu0 %698, %v208
    %v700 = vpop.permute.xlu0 %699
    %v702 = vmul.f32 %v700, %v266
    %v703 = vadd.f32 %v697, %v702
    %704 = vset.pattern.permute.xlu0 62
    %705 = vperm.xlu0 %704, %v208
    %v706 = vpop.permute.xlu0 %705
    %v708 = vmul.f32 %v706, %v276
    %v709 = vadd.f32 %v703, %v708
    %710 = vset.pattern.permute.xlu0 63
    %711 = vperm.xlu0 %710, %v208
    %v712 = vpop.permute.xlu0 %711
    %v714 = vmul.f32 %v712, %v286
    %v715 = vadd.f32 %v709, %v714
    %v717 = vrot.slane %v715, 1
    %v718 = vrot.slane %v715, 2
    %v721 = vmul.f32 %v165, %v717
    %v722 = vmul.f32 %v166, %v718
    %v725 = vrot.slane %v721, 7
    %v726 = vrot.slane %v722, 7
    %v729 = vadd.f32 %v667, %v725
    %v730 = vadd.f32 %v668, %v726
    %v731 = vld [vmem:[#allocation11] sm:$0xff]
    %v732 = vld [vmem:[#allocation11 + $0x8] sm:$0xff]
    %v733 = vld [vmem:[#allocation11 + $0x10] sm:$0xff]
    %v734 = vld [vmem:[#allocation11 + $0x18] sm:$0xff]
    %v735 = vld [vmem:[%s8] sm:$0x1]
    %v737 = vperm.slane %v735, 0
    %v741 = vrot.slane %v730, 7
    %v742 = vsel %vm217, %v741, %v729
    %v743 = vsel %vm135, %v742, 0
    %745 = vmatpush.msra.mxu0 0.0
    %746 = vmatpush.msra.mxu0 0.0
    %747 = vmatpush.msra.mxu0 0.0
    %748 = vmatpush.msra.mxu0 0.0
    %749 = vmatpush.msra.mxu0 0.0
    %750 = vmatpush.msra.mxu0 0.0
    %751 = vmatpush.msra.mxu0 0.0
    %752 = vmatpush.msra.mxu0 0.0
    %753 = vmatpush.msra.mxu0 0.0
    %754 = vmatpush.msra.mxu0 0.0
    %755 = vmatpush.msra.mxu0 0.0
    %756 = vmatpush.msra.mxu0 0.0
    %757 = vmatpush.msra.mxu0 %v734
    %758 = vmatpush.msra.mxu0 %v733
    %759 = vmatpush.msra.mxu0 %v732
    %760 = vmatpush.msra.mxu0 %v731
    %761 = vmatmul.f32.gmra.mxu0 %v743
    %v762 = vpop.f32.mrf.mxu0
    %v763 = vadd.f32 %v737, %v762
    %764 = vdwg.mxu0
    %vm765 = vcmask 254976
    %766 = vst.msk [vmem:[#allocation13] sm:$0x3] %vm765, %v763
    // Predicated region
    $region62: #{tpu_custom_call.1} parent=1 // pred_check
      _
    $region63: #{tpu_custom_call.1} parent=1 // pred_check_branch
      %768 = sbr.rel (0) target = $region65
    $region64: #{tpu_custom_call.1} parent=1 // pred_region
      %770 = vsyncadd [#allocation4], 0
      %s772 = sshll.u32 [#allocation13], 4
      %s773 = int_to_ptr.vmem [resolvable:$true] %s772
      %s774 = sshll.u32 %s9, 4
      %s775 = int_to_ptr.hbm [resolvable:$true] %s774
      %777 = dma.vmem_to_hbm [thread:$0]  %s773, 32, %s775, [#allocation4]
    $region65: #{tpu_custom_call.1} parent=1 // pred_fallthru
      _
    // Predicated region
    $region66: #{tpu_custom_call.1} parent=1 // pred_check
      _
    $region67: #{tpu_custom_call.1} parent=1 // pred_check_branch
      %779 = sbr.rel (0) target = $region69
    $region68: #{tpu_custom_call.1} parent=1 // pred_region
      %781 = dma.done [#allocation4], 32
    $region69: #{tpu_custom_call.1} parent=1 // pred_fallthru
      _
    %782 = vsyncpa [#allocation3], 1
    %783 = vsyncpa [#allocation6], 1
    %784 = vsyncpa [#allocation9], 1
    %785 = vsyncpa [#allocation12], 1
    %786 = vsyncpa [#allocation4], 1

// kernel: tpu_custom_call.1
$region0: #{tpu_custom_call.1}
  #allocation0 [shape = 'u32[]', space=smem, size = 0x4, offset = 0x4, fixed_abs, tag = 'smem constant byte address 0x4 - core index']
  #allocation1 [shape = 'u32[72,128]{1,0:T(1,128)}', space=vmem, size = 0x9000, scoped, tag = 'internal scratch']
  %s0 = inlined_call_operand.hbm [shape: f32[16,32], index: 0, kind: input, shape index: {}]
  %s1 = inlined_call_operand.hbm [shape: f32[16,32], index: 1, kind: input, shape index: {}]
  %s2 = inlined_call_operand.hbm [shape: f32[2,64], index: 2, kind: input, shape index: {}]
  %s3 = inlined_call_operand.hbm [shape: f32[32,32], index: 3, kind: input, shape index: {}]
  %s4 = inlined_call_operand.vmem [shape: f32[1,32], index: 4, kind: input, shape index: {}]
  %s5 = inlined_call_operand.hbm [shape: f32[32,32], index: 5, kind: input, shape index: {}]
  %s6 = inlined_call_operand.vmem [shape: f32[1,32], index: 6, kind: input, shape index: {}]
  %s7 = inlined_call_operand.hbm [shape: f32[32,32], index: 7, kind: input, shape index: {}]
  %s8 = inlined_call_operand.vmem [shape: f32[1,32], index: 8, kind: input, shape index: {}]
  %s9 = inlined_call_operand.hbm [shape: f32[2,32], index: 9, kind: output, shape index: {}]
  %s10 = sld [smem:[#allocation0]]
  $region70: #{tpu_custom_call.1} parent=0
    _
  %s12 = ssub.s32 1, %s10
  %s13 = scalar_select 0, %s12, %s10
  $region1: #{tpu_custom_call.1} parent=0
    #allocation2 [shape = 'u8[8192]{0}', space=vmem, size = 0x2000, scoped, tag = 'input window, operand 0, single buffered']
    #allocation3 [shape = 's32[1]{0}', space=sflag, size = 0x4, scoped, tag = 'scoped memory for tpu_custom_call.1']
    #allocation4 [shape = 's32[1]{0}', space=sflag, size = 0x4, scoped, tag = 'scoped memory for tpu_custom_call.1']
    #allocation5 [shape = 'u8[8192]{0}', space=vmem, size = 0x2000, scoped, tag = 'input window, operand 1, single buffered']
    #allocation6 [shape = 's32[1]{0}', space=sflag, size = 0x4, scoped, tag = 'scoped memory for tpu_custom_call.1']
    #allocation7 [shape = 'u8[1024]{0}', space=vmem, size = 0x400, scoped, tag = 'input window, operand 2, single buffered']
    #allocation8 [shape = 'u8[16384]{0}', space=vmem, size = 0x4000, scoped, tag = 'input window, operand 3, single buffered']
    #allocation9 [shape = 's32[1]{0}', space=sflag, size = 0x4, scoped, tag = 'scoped memory for tpu_custom_call.1']
    #allocation10 [shape = 'u8[16384]{0}', space=vmem, size = 0x4000, scoped, tag = 'input window, operand 5, single buffered']
    #allocation11 [shape = 'u8[16384]{0}', space=vmem, size = 0x4000, scoped, tag = 'input window, operand 7, single buffered']
    #allocation12 [shape = 's32[1]{0}', space=sflag, size = 0x4, scoped, tag = 'scoped memory for tpu_custom_call.1']
    #allocation13 [shape = 'u8[1024]{0}', space=vmem, size = 0x400, scoped, tag = 'output window, operand 0, single buffered']
    %14 = vsyncpa [#allocation3], 0
    %15 = vsyncpa [#allocation6], 0
    %16 = vsyncpa [#allocation9], 0
    %17 = vsyncpa [#allocation12], 0
    %18 = vsyncpa [#allocation4], 0
    // Predicated region
    $region2: #{tpu_custom_call.1} parent=1 // pred_check
      _
    $region3: #{tpu_custom_call.1} parent=1 // pred_check_branch
      %20 = sbr.rel (0) target = $region5
    $region4: #{tpu_custom_call.1} parent=1 // pred_region
      %22 = vsyncadd [#allocation3], 0
      %s23 = sshll.u32 %s0, 4
      %s24 = int_to_ptr.hbm [resolvable:$true] %s23
      %s25 = sshll.u32 [#allocation2], 4
      %s26 = int_to_ptr.vmem [resolvable:$true] %s25
      %31 = dma.hbm_to_vmem [thread:$0]  %s24, 256, %s26, [#allocation3], 128, 128, 8
    $region5: #{tpu_custom_call.1} parent=1 // pred_fallthru
      _
    // Predicated region
    $region6: #{tpu_custom_call.1} parent=1 // pred_check
      _
    $region7: #{tpu_custom_call.1} parent=1 // pred_check_branch
      %33 = sbr.rel (0) target = $region9
    $region8: #{tpu_custom_call.1} parent=1 // pred_region
      %35 = vsyncadd [#allocation6], 0
      %s36 = sshll.u32 %s1, 4
      %s37 = int_to_ptr.hbm [resolvable:$true] %s36
      %s38 = sshll.u32 [#allocation5], 4
      %s39 = int_to_ptr.vmem [resolvable:$true] %s38
      %44 = dma.hbm_to_vmem [thread:$0]  %s37, 256, %s39, [#allocation6], 128, 128, 8
    $region9: #{tpu_custom_call.1} parent=1 // pred_fallthru
      _
    // Predicated region
    $region10: #{tpu_custom_call.1} parent=1 // pred_check
      _
    $region11: #{tpu_custom_call.1} parent=1 // pred_check_branch
      %46 = sbr.rel (0) target = $region13
    $region12: #{tpu_custom_call.1} parent=1 // pred_region
      %48 = vsyncadd [#allocation6], 0
      %s50 = sshll.u32 %s2, 4
      %s51 = int_to_ptr.hbm [resolvable:$true] %s50
      %s52 = sshll.u32 [#allocation7], 4
      %s53 = int_to_ptr.vmem [resolvable:$true] %s52
      %55 = dma.hbm_to_vmem [thread:$0]  %s51, 32, %s53, [#allocation6]
    $region13: #{tpu_custom_call.1} parent=1 // pred_fallthru
      _
    // Predicated region
    $region14: #{tpu_custom_call.1} parent=1 // pred_check
      _
    $region15: #{tpu_custom_call.1} parent=1 // pred_check_branch
      %57 = sbr.rel (0) target = $region17
    $region16: #{tpu_custom_call.1} parent=1 // pred_region
      %59 = vsyncadd [#allocation9], 0
      %s60 = sshll.u32 %s3, 4
      %s61 = int_to_ptr.hbm [resolvable:$true] %s60
      %s62 = sshll.u32 [#allocation8], 4
      %s63 = int_to_ptr.vmem [resolvable:$true] %s62
      %68 = dma.hbm_to_vmem [thread:$0]  %s61, 512, %s63, [#allocation9], 128, 128, 8
    $region17: #{tpu_custom_call.1} parent=1 // pred_fallthru
      _
    // Predicated region
    $region18: #{tpu_custom_call.1} parent=1 // pred_check
      _
    $region19: #{tpu_custom_call.1} parent=1 // pred_check_branch
      %70 = sbr.rel (0) target = $region21
    $region20: #{tpu_custom_call.1} parent=1 // pred_region
      _
    $region21: #{tpu_custom_call.1} parent=1 // pred_fallthru
      _
    // Predicated region
    $region22: #{tpu_custom_call.1} parent=1 // pred_check
      _
    $region23: #{tpu_custom_call.1} parent=1 // pred_check_branch
      %72 = sbr.rel (0) target = $region25
    $region24: #{tpu_custom_call.1} parent=1 // pred_region
      %74 = vsyncadd [#allocation9], 0
      %s75 = sshll.u32 %s5, 4
      %s76 = int_to_ptr.hbm [resolvable:$true] %s75
      %s77 = sshll.u32 [#allocation10], 4
      %s78 = int_to_ptr.vmem [resolvable:$true] %s77
      %83 = dma.hbm_to_vmem [thread:$0]  %s76, 512, %s78, [#allocation9], 128, 128, 8
    $region25: #{tpu_custom_call.1} parent=1 // pred_fallthru
      _
    // Predicated region
    $region26: #{tpu_custom_call.1} parent=1 // pred_check
      _
    $region27: #{tpu_custom_call.1} parent=1 // pred_check_branch
      %85 = sbr.rel (0) target = $region29
    $region28: #{tpu_custom_call.1} parent=1 // pred_region
      _
    $region29: #{tpu_custom_call.1} parent=1 // pred_fallthru
      _
    // Predicated region
    $region30: #{tpu_custom_call.1} parent=1 // pred_check
      _
    $region31: #{tpu_custom_call.1} parent=1 // pred_check_branch
      %87 = sbr.rel (0) target = $region33
    $region32: #{tpu_custom_call.1} parent=1 // pred_region
      %89 = vsyncadd [#allocation12], 0
      %s90 = sshll.u32 %s7, 4
      %s91 = int_to_ptr.hbm [resolvable:$true] %s90
      %s92 = sshll.u32 [#allocation11], 4
      %s93 = int_to_ptr.vmem [resolvable:$true] %s92
      %98 = dma.hbm_to_vmem [thread:$0]  %s91, 512, %s93, [#allocation12], 128, 128, 8
    $region33: #{tpu_custom_call.1} parent=1 // pred_fallthru
      _
    // Predicated region
    $region34: #{tpu_custom_call.1} parent=1 // pred_check
      _
    $region35: #{tpu_custom_call.1} parent=1 // pred_check_branch
      %100 = sbr.rel (0) target = $region37
    $region36: #{tpu_custom_call.1} parent=1 // pred_region
      _
    $region37: #{tpu_custom_call.1} parent=1 // pred_fallthru
      _
    // Predicated region
    $region38: #{tpu_custom_call.1} parent=1 // pred_check
      _
    $region39: #{tpu_custom_call.1} parent=1 // pred_check_branch
      %102 = sbr.rel (0) target = $region41
    $region40: #{tpu_custom_call.1} parent=1 // pred_region
      %104 = dma.done [#allocation3], 256
    $region41: #{tpu_custom_call.1} parent=1 // pred_fallthru
      _
    // Predicated region
    $region42: #{tpu_custom_call.1} parent=1 // pred_check
      _
    $region43: #{tpu_custom_call.1} parent=1 // pred_check_branch
      %106 = sbr.rel (0) target = $region45
    $region44: #{tpu_custom_call.1} parent=1 // pred_region
      %108 = dma.done [#allocation6], 256
    $region45: #{tpu_custom_call.1} parent=1 // pred_fallthru
      _
    // Predicated region
    $region46: #{tpu_custom_call.1} parent=1 // pred_check
      _
    $region47: #{tpu_custom_call.1} parent=1 // pred_check_branch
      %110 = sbr.rel (0) target = $region49
    $region48: #{tpu_custom_call.1} parent=1 // pred_region
      %112 = dma.done [#allocation6], 32
    $region49: #{tpu_custom_call.1} parent=1 // pred_fallthru
      _
    // Predicated region
    $region50: #{tpu_custom_call.1} parent=1 // pred_check
      _
    $region51: #{tpu_custom_call.1} parent=1 // pred_check_branch
      %114 = sbr.rel (0) target = $region53
    $region52: #{tpu_custom_call.1} parent=1 // pred_region
      %116 = dma.done [#allocation9], 512
    $region53: #{tpu_custom_call.1} parent=1 // pred_fallthru
      _
    // Predicated region
    $region54: #{tpu_custom_call.1} parent=1 // pred_check
      _
    $region55: #{tpu_custom_call.1} parent=1 // pred_check_branch
      %118 = sbr.rel (0) target = $region57
    $region56: #{tpu_custom_call.1} parent=1 // pred_region
      %120 = dma.done [#allocation9], 512
    $region57: #{tpu_custom_call.1} parent=1 // pred_fallthru
      _
    // Predicated region
    $region58: #{tpu_custom_call.1} parent=1 // pred_check
      _
    $region59: #{tpu_custom_call.1} parent=1 // pred_check_branch
      %122 = sbr.rel (0) target = $region61
    $region60: #{tpu_custom_call.1} parent=1 // pred_region
      %124 = dma.done [#allocation12], 512
    $region61: #{tpu_custom_call.1} parent=1 // pred_fallthru
      _
    %v125 = vld [vmem:[#allocation2] sm:$0xff]
    %v126 = vld [vmem:[#allocation2 + $0x8] sm:$0xff]
    %v127 = vld [vmem:[#allocation8] sm:$0xff]
    %v128 = vld [vmem:[#allocation8 + $0x8] sm:$0xff]
    %v129 = vld [vmem:[#allocation8 + $0x10] sm:$0xff]
    %v130 = vld [vmem:[#allocation8 + $0x18] sm:$0xff]
    %v131 = vld [vmem:[%s4] sm:$0x1]
    %v133 = vperm.slane %v131, 0
    %vm135 = vcmask 261120
    %v137 = vsel %vm135, %v125, 0
    %v140 = vsel %vm135, %v126, 0
    %142 = vmatpush.msra.mxu0 0.0
    %143 = vmatpush.msra.mxu0 0.0
    %144 = vmatpush.msra.mxu0 0.0
    %145 = vmatpush.msra.mxu0 0.0
    %146 = vmatpush.msra.mxu0 0.0
    %147 = vmatpush.msra.mxu0 0.0
    %148 = vmatpush.msra.mxu0 0.0
    %149 = vmatpush.msra.mxu0 0.0
    %150 = vmatpush.msra.mxu0 0.0
    %151 = vmatpush.msra.mxu0 0.0
    %152 = vmatpush.msra.mxu0 0.0
    %153 = vmatpush.msra.mxu0 0.0
    %154 = vmatpush.msra.mxu0 %v130
    %155 = vmatpush.msra.mxu0 %v129
    %156 = vmatpush.msra.mxu0 %v128
    %157 = vmatpush.msra.mxu0 %v127
    %158 = vmatmul.f32.gmra.mxu0 %v137
    %v159 = vpop.f32.mrf.mxu0
    %v160 = vadd.f32 %v133, %v159
    %161 = vmatmul.f32.gmra.mxu0 %v140
    %v162 = vpop.f32.mrf.mxu0
    %v163 = vadd.f32 %v133, %v162
    %164 = vdwg.mxu0
    %v165 = vmax.f32 %v160, 0.0
    %v166 = vmax.f32 %v163, 0.0
    %v167 = vld [vmem:[#allocation5] sm:$0xff]
    %v168 = vld [vmem:[#allocation5 + $0x8] sm:$0xff]
    %v169 = vld [vmem:[#allocation10] sm:$0xff]
    %v170 = vld [vmem:[#allocation10 + $0x8] sm:$0xff]
    %v171 = vld [vmem:[#allocation10 + $0x10] sm:$0xff]
    %v172 = vld [vmem:[#allocation10 + $0x18] sm:$0xff]
    %v173 = vld [vmem:[%s6] sm:$0x1]
    %v175 = vperm.slane %v173, 0
    %v178 = vsel %vm135, %v167, 0
    %v181 = vsel %vm135, %v168, 0
    %183 = vmatpush.msra.mxu0 0.0
    %184 = vmatpush.msra.mxu0 0.0
    %185 = vmatpush.msra.mxu0 0.0
    %186 = vmatpush.msra.mxu0 0.0
    %187 = vmatpush.msra.mxu0 0.0
    %188 = vmatpush.msra.mxu0 0.0
    %189 = vmatpush.msra.mxu0 0.0
    %190 = vmatpush.msra.mxu0 0.0
    %191 = vmatpush.msra.mxu0 0.0
    %192 = vmatpush.msra.mxu0 0.0
    %193 = vmatpush.msra.mxu0 0.0
    %194 = vmatpush.msra.mxu0 0.0
    %195 = vmatpush.msra.mxu0 %v172
    %196 = vmatpush.msra.mxu0 %v171
    %197 = vmatpush.msra.mxu0 %v170
    %198 = vmatpush.msra.mxu0 %v169
    %199 = vmatmul.f32.gmra.mxu0 %v178
    %v200 = vpop.f32.mrf.mxu0
    %v201 = vadd.f32 %v175, %v200
    %202 = vmatmul.f32.gmra.mxu0 %v181
    %v203 = vpop.f32.mrf.mxu0
    %v204 = vadd.f32 %v175, %v203
    %205 = vdwg.mxu0
    %v206 = vmax.f32 %v201, 0.0
    %v207 = vmax.f32 %v204, 0.0
    %v208 = vld [vmem:[#allocation7] sm:$0x3]
    %210 = vset.pattern.permute.xlu0 0
    %211 = vperm.xlu0 %210, %v208
    %v212 = vpop.permute.xlu0 %211
    %v216 = vrot.slane %v207, 7
    %vm217 = vcmask 1041409
    %v218 = vsel %vm217, %v216, %v206
    %v220 = vmul.f32 %v212, %v218
    %221 = vset.pattern.permute.xlu0 1
    %222 = vperm.xlu0 %221, %v208
    %v223 = vpop.permute.xlu0 %222
    %v225 = vrot.slane %v206, 1
    %v226 = vsel %vm217, %v207, %v225
    %v228 = vmul.f32 %v223, %v226
    %v229 = vadd.f32 %v220, %v228
    %230 = vset.pattern.permute.xlu0 2
    %231 = vperm.xlu0 %230, %v208
    %v232 = vpop.permute.xlu0 %231
    %v234 = vrot.slane %v206, 2
    %v235 = vrot.slane %v207, 1
    %v236 = vsel %vm217, %v235, %v234
    %v238 = vmul.f32 %v232, %v236
    %v239 = vadd.f32 %v229, %v238
    %240 = vset.pattern.permute.xlu0 3
    %241 = vperm.xlu0 %240, %v208
    %v242 = vpop.permute.xlu0 %241
    %v244 = vrot.slane %v206, 3
    %v245 = vrot.slane %v207, 2
    %v246 = vsel %vm217, %v245, %v244
    %v248 = vmul.f32 %v242, %v246
    %v249 = vadd.f32 %v239, %v248
    %250 = vset.pattern.permute.xlu0 4
    %251 = vperm.xlu0 %250, %v208
    %v252 = vpop.permute.xlu0 %251
    %v254 = vrot.slane %v206, 4
    %v255 = vrot.slane %v207, 3
    %v256 = vsel %vm217, %v255, %v254
    %v258 = vmul.f32 %v252, %v256
    %v259 = vadd.f32 %v249, %v258
    %260 = vset.pattern.permute.xlu0 5
    %261 = vperm.xlu0 %260, %v208
    %v262 = vpop.permute.xlu0 %261
    %v264 = vrot.slane %v206, 5
    %v265 = vrot.slane %v207, 4
    %v266 = vsel %vm217, %v265, %v264
    %v268 = vmul.f32 %v262, %v266
    %v269 = vadd.f32 %v259, %v268
    %270 = vset.pattern.permute.xlu0 6
    %271 = vperm.xlu0 %270, %v208
    %v272 = vpop.permute.xlu0 %271
    %v274 = vrot.slane %v206, 6
    %v275 = vrot.slane %v207, 5
    %v276 = vsel %vm217, %v275, %v274
    %v278 = vmul.f32 %v272, %v276
    %v279 = vadd.f32 %v269, %v278
    %280 = vset.pattern.permute.xlu0 7
    %281 = vperm.xlu0 %280, %v208
    %v282 = vpop.permute.xlu0 %281
    %v284 = vrot.slane %v206, 7
    %v285 = vrot.slane %v207, 6
    %v286 = vsel %vm217, %v285, %v284
    %v288 = vmul.f32 %v282, %v286
    %v289 = vadd.f32 %v279, %v288
    %v291 = vrot.slane %v289, 1
    %v294 = vmul.f32 %v165, %v289
    %v295 = vmul.f32 %v166, %v291
    %v296 = vadd.f32 %v294, 0.0
    %v297 = vadd.f32 %v295, 0.0
    %298 = vset.pattern.permute.xlu0 8
    %299 = vperm.xlu0 %298, %v208
    %v300 = vpop.permute.xlu0 %299
    %v302 = vmul.f32 %v300, %v218
    %303 = vset.pattern.permute.xlu0 9
    %304 = vperm.xlu0 %303, %v208
    %v305 = vpop.permute.xlu0 %304
    %v307 = vmul.f32 %v305, %v226
    %v308 = vadd.f32 %v302, %v307
    %309 = vset.pattern.permute.xlu0 10
    %310 = vperm.xlu0 %309, %v208
    %v311 = vpop.permute.xlu0 %310
    %v313 = vmul.f32 %v311, %v236
    %v314 = vadd.f32 %v308, %v313
    %315 = vset.pattern.permute.xlu0 11
    %316 = vperm.xlu0 %315, %v208
    %v317 = vpop.permute.xlu0 %316
    %v319 = vmul.f32 %v317, %v246
    %v320 = vadd.f32 %v314, %v319
    %321 = vset.pattern.permute.xlu0 12
    %322 = vperm.xlu0 %321, %v208
    %v323 = vpop.permute.xlu0 %322
    %v325 = vmul.f32 %v323, %v256
    %v326 = vadd.f32 %v320, %v325
    %327 = vset.pattern.permute.xlu0 13
    %328 = vperm.xlu0 %327, %v208
    %v329 = vpop.permute.xlu0 %328
    %v331 = vmul.f32 %v329, %v266
    %v332 = vadd.f32 %v326, %v331
    %333 = vset.pattern.permute.xlu0 14
    %334 = vperm.xlu0 %333, %v208
    %v335 = vpop.permute.xlu0 %334
    %v337 = vmul.f32 %v335, %v276
    %v338 = vadd.f32 %v332, %v337
    %339 = vset.pattern.permute.xlu0 15
    %340 = vperm.xlu0 %339, %v208
    %v341 = vpop.permute.xlu0 %340
    %v343 = vmul.f32 %v341, %v286
    %v344 = vadd.f32 %v338, %v343
    %v346 = vrot.slane %v344, 7
    %v349 = vmul.f32 %v165, %v346
    %v350 = vmul.f32 %v166, %v344
    %v353 = vrot.slane %v349, 1
    %v354 = vrot.slane %v350, 1
    %v357 = vadd.f32 %v296, %v353
    %v358 = vadd.f32 %v297, %v354
    %359 = vset.pattern.permute.xlu0 16
    %360 = vperm.xlu0 %359, %v208
    %v361 = vpop.permute.xlu0 %360
    %v363 = vmul.f32 %v361, %v218
    %364 = vset.pattern.permute.xlu0 17
    %365 = vperm.xlu0 %364, %v208
    %v366 = vpop.permute.xlu0 %365
    %v368 = vmul.f32 %v366, %v226
    %v369 = vadd.f32 %v363, %v368
    %370 = vset.pattern.permute.xlu0 18
    %371 = vperm.xlu0 %370, %v208
    %v372 = vpop.permute.xlu0 %371
    %v374 = vmul.f32 %v372, %v236
    %v375 = vadd.f32 %v369, %v374
    %376 = vset.pattern.permute.xlu0 19
    %377 = vperm.xlu0 %376, %v208
    %v378 = vpop.permute.xlu0 %377
    %v380 = vmul.f32 %v378, %v246
    %v381 = vadd.f32 %v375, %v380
    %382 = vset.pattern.permute.xlu0 20
    %383 = vperm.xlu0 %382, %v208
    %v384 = vpop.permute.xlu0 %383
    %v386 = vmul.f32 %v384, %v256
    %v387 = vadd.f32 %v381, %v386
    %388 = vset.pattern.permute.xlu0 21
    %389 = vperm.xlu0 %388, %v208
    %v390 = vpop.permute.xlu0 %389
    %v392 = vmul.f32 %v390, %v266
    %v393 = vadd.f32 %v387, %v392
    %394 = vset.pattern.permute.xlu0 22
    %395 = vperm.xlu0 %394, %v208
    %v396 = vpop.permute.xlu0 %395
    %v398 = vmul.f32 %v396, %v276
    %v399 = vadd.f32 %v393, %v398
    %400 = vset.pattern.permute.xlu0 23
    %401 = vperm.xlu0 %400, %v208
    %v402 = vpop.permute.xlu0 %401
    %v404 = vmul.f32 %v402, %v286
    %v405 = vadd.f32 %v399, %v404
    %v407 = vrot.slane %v405, 6
    %v408 = vrot.slane %v405, 7
    %v411 = vmul.f32 %v165, %v407
    %v412 = vmul.f32 %v166, %v408
    %v415 = vrot.slane %v411, 2
    %v416 = vrot.slane %v412, 2
    %v419 = vadd.f32 %v357, %v415
    %v420 = vadd.f32 %v358, %v416
    %421 = vset.pattern.permute.xlu0 24
    %422 = vperm.xlu0 %421, %v208
    %v423 = vpop.permute.xlu0 %422
    %v425 = vmul.f32 %v423, %v218
    %426 = vset.pattern.permute.xlu0 25
    %427 = vperm.xlu0 %426, %v208
    %v428 = vpop.permute.xlu0 %427
    %v430 = vmul.f32 %v428, %v226
    %v431 = vadd.f32 %v425, %v430
    %432 = vset.pattern.permute.xlu0 26
    %433 = vperm.xlu0 %432, %v208
    %v434 = vpop.permute.xlu0 %433
    %v436 = vmul.f32 %v434, %v236
    %v437 = vadd.f32 %v431, %v436
    %438 = vset.pattern.permute.xlu0 27
    %439 = vperm.xlu0 %438, %v208
    %v440 = vpop.permute.xlu0 %439
    %v442 = vmul.f32 %v440, %v246
    %v443 = vadd.f32 %v437, %v442
    %444 = vset.pattern.permute.xlu0 28
    %445 = vperm.xlu0 %444, %v208
    %v446 = vpop.permute.xlu0 %445
    %v448 = vmul.f32 %v446, %v256
    %v449 = vadd.f32 %v443, %v448
    %450 = vset.pattern.permute.xlu0 29
    %451 = vperm.xlu0 %450, %v208
    %v452 = vpop.permute.xlu0 %451
    %v454 = vmul.f32 %v452, %v266
    %v455 = vadd.f32 %v449, %v454
    %456 = vset.pattern.permute.xlu0 30
    %457 = vperm.xlu0 %456, %v208
    %v458 = vpop.permute.xlu0 %457
    %v460 = vmul.f32 %v458, %v276
    %v461 = vadd.f32 %v455, %v460
    %462 = vset.pattern.permute.xlu0 31
    %463 = vperm.xlu0 %462, %v208
    %v464 = vpop.permute.xlu0 %463
    %v466 = vmul.f32 %v464, %v286
    %v467 = vadd.f32 %v461, %v466
    %v469 = vrot.slane %v467, 5
    %v470 = vrot.slane %v467, 6
    %v473 = vmul.f32 %v165, %v469
    %v474 = vmul.f32 %v166, %v470
    %v477 = vrot.slane %v473, 3
    %v478 = vrot.slane %v474, 3
    %v481 = vadd.f32 %v419, %v477
    %v482 = vadd.f32 %v420, %v478
    %483 = vset.pattern.permute.xlu0 32
    %484 = vperm.xlu0 %483, %v208
    %v485 = vpop.permute.xlu0 %484
    %v487 = vmul.f32 %v485, %v218
    %488 = vset.pattern.permute.xlu0 33
    %489 = vperm.xlu0 %488, %v208
    %v490 = vpop.permute.xlu0 %489
    %v492 = vmul.f32 %v490, %v226
    %v493 = vadd.f32 %v487, %v492
    %494 = vset.pattern.permute.xlu0 34
    %495 = vperm.xlu0 %494, %v208
    %v496 = vpop.permute.xlu0 %495
    %v498 = vmul.f32 %v496, %v236
    %v499 = vadd.f32 %v493, %v498
    %500 = vset.pattern.permute.xlu0 35
    %501 = vperm.xlu0 %500, %v208
    %v502 = vpop.permute.xlu0 %501
    %v504 = vmul.f32 %v502, %v246
    %v505 = vadd.f32 %v499, %v504
    %506 = vset.pattern.permute.xlu0 36
    %507 = vperm.xlu0 %506, %v208
    %v508 = vpop.permute.xlu0 %507
    %v510 = vmul.f32 %v508, %v256
    %v511 = vadd.f32 %v505, %v510
    %512 = vset.pattern.permute.xlu0 37
    %513 = vperm.xlu0 %512, %v208
    %v514 = vpop.permute.xlu0 %513
    %v516 = vmul.f32 %v514, %v266
    %v517 = vadd.f32 %v511, %v516
    %518 = vset.pattern.permute.xlu0 38
    %519 = vperm.xlu0 %518, %v208
    %v520 = vpop.permute.xlu0 %519
    %v522 = vmul.f32 %v520, %v276
    %v523 = vadd.f32 %v517, %v522
    %524 = vset.pattern.permute.xlu0 39
    %525 = vperm.xlu0 %524, %v208
    %v526 = vpop.permute.xlu0 %525
    %v528 = vmul.f32 %v526, %v286
    %v529 = vadd.f32 %v523, %v528
    %v531 = vrot.slane %v529, 4
    %v532 = vrot.slane %v529, 5
    %v535 = vmul.f32 %v165, %v531
    %v536 = vmul.f32 %v166, %v532
    %v539 = vrot.slane %v535, 4
    %v540 = vrot.slane %v536, 4
    %v543 = vadd.f32 %v481, %v539
    %v544 = vadd.f32 %v482, %v540
    %545 = vset.pattern.permute.xlu0 40
    %546 = vperm.xlu0 %545, %v208
    %v547 = vpop.permute.xlu0 %546
    %v549 = vmul.f32 %v547, %v218
    %550 = vset.pattern.permute.xlu0 41
    %551 = vperm.xlu0 %550, %v208
    %v552 = vpop.permute.xlu0 %551
    %v554 = vmul.f32 %v552, %v226
    %v555 = vadd.f32 %v549, %v554
    %556 = vset.pattern.permute.xlu0 42
    %557 = vperm.xlu0 %556, %v208
    %v558 = vpop.permute.xlu0 %557
    %v560 = vmul.f32 %v558, %v236
    %v561 = vadd.f32 %v555, %v560
    %562 = vset.pattern.permute.xlu0 43
    %563 = vperm.xlu0 %562, %v208
    %v564 = vpop.permute.xlu0 %563
    %v566 = vmul.f32 %v564, %v246
    %v567 = vadd.f32 %v561, %v566
    %568 = vset.pattern.permute.xlu0 44
    %569 = vperm.xlu0 %568, %v208
    %v570 = vpop.permute.xlu0 %569
    %v572 = vmul.f32 %v570, %v256
    %v573 = vadd.f32 %v567, %v572
    %574 = vset.pattern.permute.xlu0 45
    %575 = vperm.xlu0 %574, %v208
    %v576 = vpop.permute.xlu0 %575
    %v578 = vmul.f32 %v576, %v266
    %v579 = vadd.f32 %v573, %v578
    %580 = vset.pattern.permute.xlu0 46
    %581 = vperm.xlu0 %580, %v208
    %v582 = vpop.permute.xlu0 %581
    %v584 = vmul.f32 %v582, %v276
    %v585 = vadd.f32 %v579, %v584
    %586 = vset.pattern.permute.xlu0 47
    %587 = vperm.xlu0 %586, %v208
    %v588 = vpop.permute.xlu0 %587
    %v590 = vmul.f32 %v588, %v286
    %v591 = vadd.f32 %v585, %v590
    %v593 = vrot.slane %v591, 3
    %v594 = vrot.slane %v591, 4
    %v597 = vmul.f32 %v165, %v593
    %v598 = vmul.f32 %v166, %v594
    %v601 = vrot.slane %v597, 5
    %v602 = vrot.slane %v598, 5
    %v605 = vadd.f32 %v543, %v601
    %v606 = vadd.f32 %v544, %v602
    %607 = vset.pattern.permute.xlu0 48
    %608 = vperm.xlu0 %607, %v208
    %v609 = vpop.permute.xlu0 %608
    %v611 = vmul.f32 %v609, %v218
    %612 = vset.pattern.permute.xlu0 49
    %613 = vperm.xlu0 %612, %v208
    %v614 = vpop.permute.xlu0 %613
    %v616 = vmul.f32 %v614, %v226
    %v617 = vadd.f32 %v611, %v616
    %618 = vset.pattern.permute.xlu0 50
    %619 = vperm.xlu0 %618, %v208
    %v620 = vpop.permute.xlu0 %619
    %v622 = vmul.f32 %v620, %v236
    %v623 = vadd.f32 %v617, %v622
    %624 = vset.pattern.permute.xlu0 51
    %625 = vperm.xlu0 %624, %v208
    %v626 = vpop.permute.xlu0 %625
    %v628 = vmul.f32 %v626, %v246
    %v629 = vadd.f32 %v623, %v628
    %630 = vset.pattern.permute.xlu0 52
    %631 = vperm.xlu0 %630, %v208
    %v632 = vpop.permute.xlu0 %631
    %v634 = vmul.f32 %v632, %v256
    %v635 = vadd.f32 %v629, %v634
    %636 = vset.pattern.permute.xlu0 53
    %637 = vperm.xlu0 %636, %v208
    %v638 = vpop.permute.xlu0 %637
    %v640 = vmul.f32 %v638, %v266
    %v641 = vadd.f32 %v635, %v640
    %642 = vset.pattern.permute.xlu0 54
    %643 = vperm.xlu0 %642, %v208
    %v644 = vpop.permute.xlu0 %643
    %v646 = vmul.f32 %v644, %v276
    %v647 = vadd.f32 %v641, %v646
    %648 = vset.pattern.permute.xlu0 55
    %649 = vperm.xlu0 %648, %v208
    %v650 = vpop.permute.xlu0 %649
    %v652 = vmul.f32 %v650, %v286
    %v653 = vadd.f32 %v647, %v652
    %v655 = vrot.slane %v653, 2
    %v656 = vrot.slane %v653, 3
    %v659 = vmul.f32 %v165, %v655
    %v660 = vmul.f32 %v166, %v656
    %v663 = vrot.slane %v659, 6
    %v664 = vrot.slane %v660, 6
    %v667 = vadd.f32 %v605, %v663
    %v668 = vadd.f32 %v606, %v664
    %669 = vset.pattern.permute.xlu0 56
    %670 = vperm.xlu0 %669, %v208
    %v671 = vpop.permute.xlu0 %670
    %v673 = vmul.f32 %v671, %v218
    %674 = vset.pattern.permute.xlu0 57
    %675 = vperm.xlu0 %674, %v208
    %v676 = vpop.permute.xlu0 %675
    %v678 = vmul.f32 %v676, %v226
    %v679 = vadd.f32 %v673, %v678
    %680 = vset.pattern.permute.xlu0 58
    %681 = vperm.xlu0 %680, %v208
    %v682 = vpop.permute.xlu0 %681
    %v684 = vmul.f32 %v682, %v236
    %v685 = vadd.f32 %v679, %v684
    %686 = vset.pattern.permute.xlu0 59
    %687 = vperm.xlu0 %686, %v208
    %v688 = vpop.permute.xlu0 %687
    %v690 = vmul.f32 %v688, %v246
    %v691 = vadd.f32 %v685, %v690
    %692 = vset.pattern.permute.xlu0 60
    %693 = vperm.xlu0 %692, %v208
    %v694 = vpop.permute.xlu0 %693
    %v696 = vmul.f32 %v694, %v256
    %v697 = vadd.f32 %v691, %v696
    %698 = vset.pattern.permute.xlu0 61
    %699 = vperm.xlu0 %698, %v208
    %v700 = vpop.permute.xlu0 %699
    %v702 = vmul.f32 %v700, %v266
    %v703 = vadd.f32 %v697, %v702
    %704 = vset.pattern.permute.xlu0 62
    %705 = vperm.xlu0 %704, %v208
    %v706 = vpop.permute.xlu0 %705
    %v708 = vmul.f32 %v706, %v276
    %v709 = vadd.f32 %v703, %v708
    %710 = vset.pattern.permute.xlu0 63
    %711 = vperm.xlu0 %710, %v208
    %v712 = vpop.permute.xlu0 %711
    %v714 = vmul.f32 %v712, %v286
    %v715 = vadd.f32 %v709, %v714
    %v717 = vrot.slane %v715, 1
    %v718 = vrot.slane %v715, 2
    %v721 = vmul.f32 %v165, %v717
    %v722 = vmul.f32 %v166, %v718
    %v725 = vrot.slane %v721, 7
    %v726 = vrot.slane %v722, 7
    %v729 = vadd.f32 %v667, %v725
    %v730 = vadd.f32 %v668, %v726
    %v731 = vld [vmem:[#allocation11] sm:$0xff]
    %v732 = vld [vmem:[#allocation11 + $0x8] sm:$0xff]
    %v733 = vld [vmem:[#allocation11 + $0x10] sm:$0xff]
    %v734 = vld [vmem:[#allocation11 + $0x18] sm:$0xff]
    %v735 = vld [vmem:[%s8] sm:$0x1]
    %v737 = vperm.slane %v735, 0
    %v741 = vrot.slane %v730, 7
    %v742 = vsel %vm217, %v741, %v729
    %v743 = vsel %vm135, %v742, 0
    %745 = vmatpush.msra.mxu0 0.0
    %746 = vmatpush.msra.mxu0 0.0
    %747 = vmatpush.msra.mxu0 0.0
    %748 = vmatpush.msra.mxu0 0.0
    %749 = vmatpush.msra.mxu0 0.0
    %750 = vmatpush.msra.mxu0 0.0
    %751 = vmatpush.msra.mxu0 0.0
    %752 = vmatpush.msra.mxu0 0.0
    %753 = vmatpush.msra.mxu0 0.0
    %754 = vmatpush.msra.mxu0 0.0
    %755 = vmatpush.msra.mxu0 0.0
    %756 = vmatpush.msra.mxu0 0.0
    %757 = vmatpush.msra.mxu0 %v734
    %758 = vmatpush.msra.mxu0 %v733
    %759 = vmatpush.msra.mxu0 %v732
    %760 = vmatpush.msra.mxu0 %v731
    %761 = vmatmul.f32.gmra.mxu0 %v743
    %v762 = vpop.f32.mrf.mxu0
    %v763 = vadd.f32 %v737, %v762
    %764 = vdwg.mxu0
    %vm765 = vcmask 254976
    %766 = vst.msk [vmem:[#allocation13] sm:$0x3] %vm765, %v763
    // Predicated region
    $region62: #{tpu_custom_call.1} parent=1 // pred_check
      _
    $region63: #{tpu_custom_call.1} parent=1 // pred_check_branch
      %768 = sbr.rel (0) target = $region65
    $region64: #{tpu_custom_call.1} parent=1 // pred_region
      %770 = vsyncadd [#allocation4], 0
      %s772 = sshll.u32 [#allocation13], 4
      %s773 = int_to_ptr.vmem [resolvable:$true] %s772
      %s774 = sshll.u32 %s9, 4
      %s775 = int_to_ptr.hbm [resolvable:$true] %s774
      %777 = dma.vmem_to_hbm [thread:$0]  %s773, 32, %s775, [#allocation4]
    $region65: #{tpu_custom_call.1} parent=1 // pred_fallthru
      _
    // Predicated region
    $region66: #{tpu_custom_call.1} parent=1 // pred_check
      _
    $region67: #{tpu_custom_call.1} parent=1 // pred_check_branch
      %779 = sbr.rel (0) target = $region69
    $region68: #{tpu_custom_call.1} parent=1 // pred_region
      %781 = dma.done [#allocation4], 32
    $region69: #{tpu_custom_call.1} parent=1 // pred_fallthru
      _
    %782 = vsyncpa [#allocation3], 1
    %783 = vsyncpa [#allocation6], 1
    %784 = vsyncpa [#allocation9], 1
    %785 = vsyncpa [#allocation12], 1
    %786 = vsyncpa [#allocation4], 1

</llo_original>
